<compile_context>
chip_gen: v7x
topology: tpu7x:2x2x1
jax: 0.10.0
libtpu: 0.0.40
codegen_flags: <defaults>
</compile_context>

<pallas_src>
import functools

import numpy as np
import jax
import jax.numpy as jnp
from jax import lax
from jax.experimental import pallas as pl
from jax.experimental.pallas import tpu as pltpu


# ---------------------------------------------------------------------------
# One-time parameter / constant preparation (hoisted out of the forward).
# ---------------------------------------------------------------------------
def prepare_decoder_block(params, N, H, W):
    Cin, Cout = params["up_w"].shape[0], params["up_w"].shape[1]
    HH, WW = 2 * H, 2 * W
    HW, P = H * W, HH * WW
    L = N * P                       # lane extent of upsampled activations
    CP = 2 * Cout                   # padded channel rows (up + skip after cat)
    assert CP % 8 == 0, "channel rows must be sublane-tile aligned"

    # ConvTranspose2d(k=2,s=2) per-subpixel channel weights (t = a*2 + b),
    # zero-padded to CP output rows so cat([up, skip]) is a plain aligned add.
    up_w = jnp.asarray(params["up_w"], jnp.float32)                    # (Cin,Cout,2,2)
    wt = jnp.transpose(up_w, (2, 3, 1, 0)).reshape(4, Cout, Cin)
    wup = jnp.concatenate(
        [wt, jnp.zeros((4, CP - Cout, Cin), jnp.float32)], axis=1)     # (4, CP, Cin)

    # Combined 0/1 pixel-shuffle "spread": row t*N*HW + n*HW + i*W + j maps to
    # col n*P + (2i+a)*WW + (2j+b).  One matmul for all four subpixels.
    sp = np.zeros((4 * N * HW, L), np.float32)
    for a in range(2):
        for b in range(2):
            t = a * 2 + b
            for n in range(N):
                for i in range(H):
                    for j in range(W):
                        sp[t * N * HW + n * HW + i * W + j,
                           n * P + (2 * i + a) * WW + (2 * j + b)] = 1.0

    # Shared 3x3 conv weights in tap-major im2col order (no per-image kron).
    # conv1 gets CP output rows (rows >= Cout are zero); conv2 gets zero
    # columns for the padded input channels.
    w1 = jnp.transpose(jnp.asarray(params["conv1_w"], jnp.float32),
                       (0, 2, 3, 1)).reshape(Cout, 9 * CP)
    w1 = jnp.concatenate(
        [w1, jnp.zeros((CP - Cout, 9 * CP), jnp.float32)], axis=0)     # (CP, 9*CP)
    w2 = jnp.transpose(jnp.asarray(params["conv2_w"], jnp.float32),
                       (0, 2, 3, 1))                                    # (Cout,3,3,Cout)
    w2 = jnp.concatenate(
        [w2, jnp.zeros((Cout, 3, 3, CP - Cout), jnp.float32)],
        axis=3).reshape(Cout, 9 * CP)                                   # (Cout, 9*CP)

    # Per-channel vectors packed into ONE (CP, 5) operand:
    #   col 0 = ConvT bias, 1/2 = bn1 gamma/beta, 3/4 = bn2 gamma/beta.
    def pad(v, fill):
        return jnp.concatenate([jnp.asarray(v, jnp.float32),
                                jnp.full((CP - Cout,), fill, jnp.float32)])
    vecs = jnp.stack([pad(params["up_b"], 0.0),
                      pad(params["bn1_g"], 1.0), pad(params["bn1_b"], 0.0),
                      pad(params["bn2_g"], 1.0), pad(params["bn2_b"], 0.0)],
                     axis=1)                                            # (CP, 5)

    # 3x3 boundary-validity masks, one row per tap (tap = (dy+1)*3 + (dx+1)),
    # over the (image, hh, ww) lane axis.  Also kills cross-image roll wrap.
    lane = np.arange(L)
    hh, ww = (lane % P) // WW, lane % WW
    masks = np.zeros((9, L), np.float32)
    t = 0
    for dy in (-1, 0, 1):
        for dx in (-1, 0, 1):
            masks[t] = ((hh + dy >= 0) & (hh + dy < HH) &
                        (ww + dx >= 0) & (ww + dx < WW))
            t += 1

    # NOTE: conv1_b / conv2_b are intentionally unused -- a per-channel conv
    # bias is exactly cancelled by the batch-mean subtraction of the
    # training-mode BatchNorm that immediately follows each conv.
    return dict(wup=wup, sp=jnp.asarray(sp), w1=w1, w2=w2, vecs=vecs,
                masks=jnp.asarray(masks))


# ---------------------------------------------------------------------------
# Fused decoder-block kernel (single invocation, everything in VMEM).
# ---------------------------------------------------------------------------
def _decoder_block_kernel(x_ref, skip_ref, wup_ref, sp_ref, w1_ref, w2_ref,
                          vec_ref, mask_ref, o_ref, *, N, Cout, H, W,
                          eps=1e-5):
    HH, WW = 2 * H, 2 * W
    P = HH * WW
    L = N * P                               # lanes of upsampled activations
    inv_cnt = 1.0 / float(L)                # BN element count per channel
    masks = mask_ref[...]                   # (9, L) 0/1 float32
    vec = vec_ref[...]                      # (CP, 5) packed per-channel params

    # -- 3x3 im2col: 8 single lane rolls + boundary masks, stacked tap-major.
    # pltpu.roll follows np.roll semantics (out[l] = z[l - shift]); reading tap
    # offset s (out[l] = z[l + s]) therefore uses shift = -s.
    def im2col(z):
        cols, t = [], 0
        for dy in (-1, 0, 1):
            for dx in (-1, 0, 1):
                s = dy * WW + dx
                if s == 0:
                    cols.append(z)                        # center tap: no mask
                else:
                    cols.append(pltpu.roll(z, (-s) % L, axis=1)
                                * masks[t:t + 1, :])
                t += 1
        return jnp.concatenate(cols, axis=0)              # (9*C, L)

    # -- training-mode BatchNorm (centered two-pass variance) + ReLU ---------
    def bn_relu(y, gamma, beta):
        mean = jnp.sum(y, axis=1, keepdims=True) * inv_cnt
        d = y - mean
        var = jnp.sum(d * d, axis=1, keepdims=True) * inv_cnt
        scale = gamma * lax.rsqrt(var + eps)
        return jnp.maximum(d * scale + beta, 0.0)

    # -- ConvTranspose2d(k=2,s=2): 4 subpixel channel matmuls + ONE spread ---
    x = x_ref[...]                                        # (Cin, N*H*W)
    ch = [jnp.dot(wup_ref[t], x, preferred_element_type=jnp.float32)
          for t in range(4)]                              # 4 x (CP, N*H*W)
    up = jnp.dot(jnp.concatenate(ch, axis=1), sp_ref[...],
                 preferred_element_type=jnp.float32)      # (CP, L)
    up = up + vec[:, 0:1]                                 # ConvT bias

    # -- cat([up, skip], dim=channel) as a plain add: up rows >= Cout and
    #    skip rows < Cout are zero, so the sum IS the concatenation. ---------
    cat = up + skip_ref[...]                              # (CP, L)

    # -- conv1 -> BN1 -> ReLU (conv bias folded away by BN mean) -------------
    c1 = jnp.dot(w1_ref[...], im2col(cat), preferred_element_type=jnp.float32)
    r1 = bn_relu(c1, vec[:, 1:2], vec[:, 2:3])            # (CP, L), pad rows 0

    # -- conv2 -> BN2 -> ReLU, single lane-dense store ------------------------
    c2 = jnp.dot(w2_ref[...], im2col(r1), preferred_element_type=jnp.float32)
    o_ref[...] = bn_relu(c2, vec[0:Cout, 3:4], vec[0:Cout, 4:5])


# ---------------------------------------------------------------------------
# decoder_block forward (NCHW in / NCHW out, like the PyTorch module)
# ---------------------------------------------------------------------------
@jax.jit
def decoder_block_forward(prep, inputs_nchw, skip_nchw):
    N, Cin, H, W = inputs_nchw.shape
    Cout = prep["w2"].shape[0]
    CP = prep["w1"].shape[0]
    HH, WW = 2 * H, 2 * W
    P = HH * WW

    # Activation re-layout (tiny): rows = channel, lanes = (image, spatial).
    x2 = jnp.transpose(inputs_nchw, (1, 0, 2, 3)).reshape(Cin, N * H * W)
    skip2 = jnp.transpose(skip_nchw, (1, 0, 2, 3)).reshape(Cout, N * P)
    skip2 = jnp.concatenate(
        [jnp.zeros((CP - Cout, N * P), skip2.dtype), skip2], axis=0)

    vmem = pl.BlockSpec(memory_space=pltpu.MemorySpace.VMEM)
    kernel = functools.partial(_decoder_block_kernel,
                               N=N, Cout=Cout, H=H, W=W)
    out2 = pl.pallas_call(
        kernel,
        out_shape=jax.ShapeDtypeStruct((Cout, N * P), jnp.float32),
        in_specs=[vmem] * 8,
        out_specs=vmem,
    )(x2, skip2, prep["wup"], prep["sp"], prep["w1"], prep["w2"],
      prep["vecs"], prep["masks"])
    return jnp.transpose(out2.reshape(Cout, N, HH, WW), (1, 0, 2, 3))


# ---------------------------------------------------------------------------
# Pure-JAX reference (matches PyTorch training-mode forward) for self-check.
# ---------------------------------------------------------------------------
def _reference_forward(params, inputs_nchw, skip_nchw, eps=1e-5):
    N, Cin, H, W = inputs_nchw.shape
    Cout = params["up_w"].shape[1]
    up = jnp.einsum("ncij,cdab->ndiajb", inputs_nchw, params["up_w"])
    up = up.reshape(N, Cout, 2 * H, 2 * W) + params["up_b"][None, :, None, None]
    x = jnp.concatenate([up, skip_nchw], axis=1)

    def conv_bn_relu(z, w, b, gamma, beta):
        y = lax.conv_general_dilated(z, w, (1, 1), ((1, 1), (1, 1)),
                                     dimension_numbers=("NCHW", "OIHW", "NCHW"))
        y = y + b[None, :, None, None]
        m = jnp.mean(y, axis=(0, 2, 3), keepdims=True)
        v = jnp.mean((y - m) ** 2, axis=(0, 2, 3), keepdims=True)
        y = (y - m) * lax.rsqrt(v + eps) * gamma[None, :, None, None] \
            + beta[None, :, None, None]
        return jnp.maximum(y, 0.0)

    x = conv_bn_relu(x, params["conv1_w"], params["conv1_b"],
                     params["bn1_g"], params["bn1_b"])
    x = conv_bn_relu(x, params["conv2_w"], params["conv2_b"],
                     params["bn2_g"], params["bn2_b"])
    return x


if __name__ == "__main__":
    in_c, out_c = 8, 4
    N, H, W = 2, 8, 8          # inputs: (N, in_c, 8, 8); skip: (N, out_c, 16, 16)

    key = jax.random.PRNGKey(0)
    k = jax.random.split(key, 12)
    params = dict(
        up_w=0.1 * jax.random.normal(k[0], (in_c, out_c, 2, 2), jnp.float32),
        up_b=0.1 * jax.random.normal(k[1], (out_c,), jnp.float32),
        conv1_w=0.1 * jax.random.normal(k[2], (out_c, 2 * out_c, 3, 3), jnp.float32),
        conv1_b=0.1 * jax.random.normal(k[3], (out_c,), jnp.float32),
        bn1_g=1.0 + 0.1 * jax.random.normal(k[4], (out_c,), jnp.float32),
        bn1_b=0.1 * jax.random.normal(k[5], (out_c,), jnp.float32),
        conv2_w=0.1 * jax.random.normal(k[6], (out_c, out_c, 3, 3), jnp.float32),
        conv2_b=0.1 * jax.random.normal(k[7], (out_c,), jnp.float32),
        bn2_g=1.0 + 0.1 * jax.random.normal(k[8], (out_c,), jnp.float32),
        bn2_b=0.1 * jax.random.normal(k[9], (out_c,), jnp.float32),
    )
    inputs = jax.random.normal(k[10], (N, in_c, H, W), jnp.float32)
    skip = jax.random.normal(k[11], (N, out_c, 2 * H, 2 * W), jnp.float32)

    prep = prepare_decoder_block(params, N, H, W)   # one-time weight re-layout
    out = decoder_block_forward(prep, inputs, skip)
    out = jax.block_until_ready(out)
    assert out.shape == (N, out_c, 2 * H, 2 * W), out.shape
    assert bool(jnp.all(jnp.isfinite(out)))

    ref = _reference_forward(params, inputs, skip)
    err = float(jnp.max(jnp.abs(out - ref)))
    assert err < 2e-3, f"max |kernel - reference| = {err}"
    print("KERNEL_OK")
</pallas_src>

<mosaic_0001>
module attributes {stable_mosaic.version = 11 : i64} {
  func.func @_decoder_block_kernel(%arg0: memref<8x128xf32, #tpu.memory_space<vmem>>, %arg1: memref<8x512xf32, #tpu.memory_space<vmem>>, %arg2: memref<4x8x8xf32, #tpu.memory_space<vmem>>, %arg3: memref<512x512xf32, #tpu.memory_space<vmem>>, %arg4: memref<8x72xf32, #tpu.memory_space<vmem>>, %arg5: memref<4x72xf32, #tpu.memory_space<vmem>>, %arg6: memref<8x5xf32, #tpu.memory_space<vmem>>, %arg7: memref<9x512xf32, #tpu.memory_space<vmem>>, %arg8: memref<4x512xf32, #tpu.memory_space<vmem>>) attributes {dimension_semantics = [], scalar_prefetch = 0 : i64, scratch_operands = 0 : i64, tpu.core_type = #tpu.core_type<tc>} {
    %c0 = arith.constant 0 : index
    %c0_0 = arith.constant 0 : index
    %0 = vector.load %arg7[%c0, %c0_0] : memref<9x512xf32, #tpu.memory_space<vmem>>, vector<9x512xf32>
    %c0_1 = arith.constant 0 : index
    %c0_2 = arith.constant 0 : index
    %1 = vector.load %arg6[%c0_1, %c0_2] : memref<8x5xf32, #tpu.memory_space<vmem>>, vector<8x5xf32>
    %c0_3 = arith.constant 0 : index
    %c0_4 = arith.constant 0 : index
    %2 = vector.load %arg0[%c0_3, %c0_4] : memref<8x128xf32, #tpu.memory_space<vmem>>, vector<8x128xf32>
    %c0_5 = arith.constant 0 : index
    %c0_6 = arith.constant 0 : index
    %c0_7 = arith.constant 0 : index
    %3 = vector.load %arg2[%c0_5, %c0_6, %c0_7] : memref<4x8x8xf32, #tpu.memory_space<vmem>>, vector<1x8x8xf32>
    %4 = vector.shape_cast %3 : vector<1x8x8xf32> to vector<8x8xf32>
    %cst = arith.constant dense<0.000000e+00> : vector<8x128xf32>
    %5 = tpu.matmul %4, %2, %cst {dimension_numbers = #tpu.dot_dimension_numbers<[1], [0], [0], [1], [0, 0, 1, 1], [], []>} : vector<8x8xf32>, vector<8x128xf32>, vector<8x128xf32> -> vector<8x128xf32>
    %c1 = arith.constant 1 : index
    %c0_8 = arith.constant 0 : index
    %c0_9 = arith.constant 0 : index
    %6 = vector.load %arg2[%c1, %c0_8, %c0_9] : memref<4x8x8xf32, #tpu.memory_space<vmem>>, vector<1x8x8xf32>
    %7 = vector.shape_cast %6 : vector<1x8x8xf32> to vector<8x8xf32>
    %cst_10 = arith.constant dense<0.000000e+00> : vector<8x128xf32>
    %8 = tpu.matmul %7, %2, %cst_10 {dimension_numbers = #tpu.dot_dimension_numbers<[1], [0], [0], [1], [0, 0, 1, 1], [], []>} : vector<8x8xf32>, vector<8x128xf32>, vector<8x128xf32> -> vector<8x128xf32>
    %c2 = arith.constant 2 : index
    %c0_11 = arith.constant 0 : index
    %c0_12 = arith.constant 0 : index
    %9 = vector.load %arg2[%c2, %c0_11, %c0_12] : memref<4x8x8xf32, #tpu.memory_space<vmem>>, vector<1x8x8xf32>
    %10 = vector.shape_cast %9 : vector<1x8x8xf32> to vector<8x8xf32>
    %cst_13 = arith.constant dense<0.000000e+00> : vector<8x128xf32>
    %11 = tpu.matmul %10, %2, %cst_13 {dimension_numbers = #tpu.dot_dimension_numbers<[1], [0], [0], [1], [0, 0, 1, 1], [], []>} : vector<8x8xf32>, vector<8x128xf32>, vector<8x128xf32> -> vector<8x128xf32>
    %c3 = arith.constant 3 : index
    %c0_14 = arith.constant 0 : index
    %c0_15 = arith.constant 0 : index
    %12 = vector.load %arg2[%c3, %c0_14, %c0_15] : memref<4x8x8xf32, #tpu.memory_space<vmem>>, vector<1x8x8xf32>
    %13 = vector.shape_cast %12 : vector<1x8x8xf32> to vector<8x8xf32>
    %cst_16 = arith.constant dense<0.000000e+00> : vector<8x128xf32>
    %14 = tpu.matmul %13, %2, %cst_16 {dimension_numbers = #tpu.dot_dimension_numbers<[1], [0], [0], [1], [0, 0, 1, 1], [], []>} : vector<8x8xf32>, vector<8x128xf32>, vector<8x128xf32> -> vector<8x128xf32>
    %15 = tpu.concatenate %5, %8, %11, %14 in 1 : vector<8x128xf32>, vector<8x128xf32>, vector<8x128xf32>, vector<8x128xf32> -> vector<8x512xf32>
    %c0_17 = arith.constant 0 : index
    %c0_18 = arith.constant 0 : index
    %16 = vector.load %arg3[%c0_17, %c0_18] : memref<512x512xf32, #tpu.memory_space<vmem>>, vector<512x512xf32>
    %cst_19 = arith.constant dense<0.000000e+00> : vector<8x512xf32>
    %17 = tpu.matmul %15, %16, %cst_19 {dimension_numbers = #tpu.dot_dimension_numbers<[1], [0], [0], [1], [0, 0, 1, 1], [], []>} : vector<8x512xf32>, vector<512x512xf32>, vector<8x512xf32> -> vector<8x512xf32>
    %18 = vector.extract_strided_slice %1 {offsets = [0, 0], sizes = [8, 1], strides = [1, 1]} : vector<8x5xf32> to vector<8x1xf32>
    %19 = vector.broadcast %18 : vector<8x1xf32> to vector<8x512xf32>
    %20 = arith.addf %17, %19 : vector<8x512xf32>
    %c0_20 = arith.constant 0 : index
    %c0_21 = arith.constant 0 : index
    %21 = vector.load %arg1[%c0_20, %c0_21] : memref<8x512xf32, #tpu.memory_space<vmem>>, vector<8x512xf32>
    %22 = arith.addf %20, %21 : vector<8x512xf32>
    %c0_22 = arith.constant 0 : index
    %c0_23 = arith.constant 0 : index
    %23 = vector.load %arg4[%c0_22, %c0_23] : memref<8x72xf32, #tpu.memory_space<vmem>>, vector<8x72xf32>
    %c17_i32 = arith.constant 17 : i32
    %24 = tpu.dynamic_rotate %22 by %c17_i32 dim 1 : vector<8x512xf32>, i32 -> vector<8x512xf32>
    %25 = vector.extract_strided_slice %0 {offsets = [0, 0], sizes = [1, 512], strides = [1, 1]} : vector<9x512xf32> to vector<1x512xf32>
    %26 = vector.broadcast %25 : vector<1x512xf32> to vector<8x512xf32>
    %27 = arith.mulf %24, %26 : vector<8x512xf32>
    %c16_i32 = arith.constant 16 : i32
    %28 = tpu.dynamic_rotate %22 by %c16_i32 dim 1 : vector<8x512xf32>, i32 -> vector<8x512xf32>
    %29 = vector.extract_strided_slice %0 {offsets = [1, 0], sizes = [1, 512], strides = [1, 1]} : vector<9x512xf32> to vector<1x512xf32>
    %30 = vector.broadcast %29 : vector<1x512xf32> to vector<8x512xf32>
    %31 = arith.mulf %28, %30 : vector<8x512xf32>
    %c15_i32 = arith.constant 15 : i32
    %32 = tpu.dynamic_rotate %22 by %c15_i32 dim 1 : vector<8x512xf32>, i32 -> vector<8x512xf32>
    %33 = vector.extract_strided_slice %0 {offsets = [2, 0], sizes = [1, 512], strides = [1, 1]} : vector<9x512xf32> to vector<1x512xf32>
    %34 = vector.broadcast %33 : vector<1x512xf32> to vector<8x512xf32>
    %35 = arith.mulf %32, %34 : vector<8x512xf32>
    %c1_i32 = arith.constant 1 : i32
    %36 = tpu.dynamic_rotate %22 by %c1_i32 dim 1 : vector<8x512xf32>, i32 -> vector<8x512xf32>
    %37 = vector.extract_strided_slice %0 {offsets = [3, 0], sizes = [1, 512], strides = [1, 1]} : vector<9x512xf32> to vector<1x512xf32>
    %38 = vector.broadcast %37 : vector<1x512xf32> to vector<8x512xf32>
    %39 = arith.mulf %36, %38 : vector<8x512xf32>
    %c511_i32 = arith.constant 511 : i32
    %40 = tpu.dynamic_rotate %22 by %c511_i32 dim 1 : vector<8x512xf32>, i32 -> vector<8x512xf32>
    %41 = vector.extract_strided_slice %0 {offsets = [5, 0], sizes = [1, 512], strides = [1, 1]} : vector<9x512xf32> to vector<1x512xf32>
    %42 = vector.broadcast %41 : vector<1x512xf32> to vector<8x512xf32>
    %43 = arith.mulf %40, %42 : vector<8x512xf32>
    %c497_i32 = arith.constant 497 : i32
    %44 = tpu.dynamic_rotate %22 by %c497_i32 dim 1 : vector<8x512xf32>, i32 -> vector<8x512xf32>
    %45 = vector.extract_strided_slice %0 {offsets = [6, 0], sizes = [1, 512], strides = [1, 1]} : vector<9x512xf32> to vector<1x512xf32>
    %46 = vector.broadcast %45 : vector<1x512xf32> to vector<8x512xf32>
    %47 = arith.mulf %44, %46 : vector<8x512xf32>
    %c496_i32 = arith.constant 496 : i32
    %48 = tpu.dynamic_rotate %22 by %c496_i32 dim 1 : vector<8x512xf32>, i32 -> vector<8x512xf32>
    %49 = vector.extract_strided_slice %0 {offsets = [7, 0], sizes = [1, 512], strides = [1, 1]} : vector<9x512xf32> to vector<1x512xf32>
    %50 = vector.broadcast %49 : vector<1x512xf32> to vector<8x512xf32>
    %51 = arith.mulf %48, %50 : vector<8x512xf32>
    %c495_i32 = arith.constant 495 : i32
    %52 = tpu.dynamic_rotate %22 by %c495_i32 dim 1 : vector<8x512xf32>, i32 -> vector<8x512xf32>
    %53 = vector.extract_strided_slice %0 {offsets = [8, 0], sizes = [1, 512], strides = [1, 1]} : vector<9x512xf32> to vector<1x512xf32>
    %54 = vector.broadcast %53 : vector<1x512xf32> to vector<8x512xf32>
    %55 = arith.mulf %52, %54 : vector<8x512xf32>
    %56 = tpu.concatenate %27, %31, %35, %39, %22, %43, %47, %51, %55 in 0 : vector<8x512xf32>, vector<8x512xf32>, vector<8x512xf32>, vector<8x512xf32>, vector<8x512xf32>, vector<8x512xf32>, vector<8x512xf32>, vector<8x512xf32>, vector<8x512xf32> -> vector<72x512xf32>
    %cst_24 = arith.constant dense<0.000000e+00> : vector<8x512xf32>
    %57 = tpu.matmul %23, %56, %cst_24 {dimension_numbers = #tpu.dot_dimension_numbers<[1], [0], [0], [1], [0, 0, 1, 1], [], []>} : vector<8x72xf32>, vector<72x512xf32>, vector<8x512xf32> -> vector<8x512xf32>
    %58 = vector.extract_strided_slice %1 {offsets = [0, 1], sizes = [8, 1], strides = [1, 1]} : vector<8x5xf32> to vector<8x1xf32>
    %59 = vector.extract_strided_slice %1 {offsets = [0, 2], sizes = [8, 1], strides = [1, 1]} : vector<8x5xf32> to vector<8x1xf32>
    %cst_25 = arith.constant dense<0.000000e+00> : vector<8xf32>
    %60 = vector.multi_reduction <add>, %57, %cst_25 [1] : vector<8x512xf32> to vector<8xf32>
    %61 = vector.shape_cast %60 : vector<8xf32> to vector<8x1xf32>
    %cst_26 = arith.constant 0.001953125 : f32
    %62 = vector.broadcast %cst_26 : f32 to vector<8x1xf32>
    %63 = arith.mulf %61, %62 : vector<8x1xf32>
    %64 = vector.broadcast %63 : vector<8x1xf32> to vector<8x512xf32>
    %65 = arith.subf %57, %64 : vector<8x512xf32>
    %66 = arith.mulf %65, %65 : vector<8x512xf32>
    %cst_27 = arith.constant dense<0.000000e+00> : vector<8xf32>
    %67 = vector.multi_reduction <add>, %66, %cst_27 [1] : vector<8x512xf32> to vector<8xf32>
    %68 = vector.shape_cast %67 : vector<8xf32> to vector<8x1xf32>
    %cst_28 = arith.constant 0.001953125 : f32
    %69 = vector.broadcast %cst_28 : f32 to vector<8x1xf32>
    %70 = arith.mulf %68, %69 : vector<8x1xf32>
    %cst_29 = arith.constant 9.99999974E-6 : f32
    %71 = vector.broadcast %cst_29 : f32 to vector<8x1xf32>
    %72 = arith.addf %70, %71 : vector<8x1xf32>
    %73 = math.rsqrt %72 : vector<8x1xf32>
    %74 = arith.mulf %58, %73 : vector<8x1xf32>
    %75 = vector.broadcast %74 : vector<8x1xf32> to vector<8x512xf32>
    %76 = arith.mulf %65, %75 : vector<8x512xf32>
    %77 = vector.broadcast %59 : vector<8x1xf32> to vector<8x512xf32>
    %78 = arith.addf %76, %77 : vector<8x512xf32>
    %cst_30 = arith.constant 0.000000e+00 : f32
    %79 = vector.broadcast %cst_30 : f32 to vector<8x512xf32>
    %80 = arith.maximumf %78, %79 : vector<8x512xf32>
    %c0_31 = arith.constant 0 : index
    %c0_32 = arith.constant 0 : index
    %81 = vector.load %arg5[%c0_31, %c0_32] : memref<4x72xf32, #tpu.memory_space<vmem>>, vector<4x72xf32>
    %c17_i32_33 = arith.constant 17 : i32
    %82 = tpu.dynamic_rotate %80 by %c17_i32_33 dim 1 : vector<8x512xf32>, i32 -> vector<8x512xf32>
    %83 = vector.extract_strided_slice %0 {offsets = [0, 0], sizes = [1, 512], strides = [1, 1]} : vector<9x512xf32> to vector<1x512xf32>
    %84 = vector.broadcast %83 : vector<1x512xf32> to vector<8x512xf32>
    %85 = arith.mulf %82, %84 : vector<8x512xf32>
    %c16_i32_34 = arith.constant 16 : i32
    %86 = tpu.dynamic_rotate %80 by %c16_i32_34 dim 1 : vector<8x512xf32>, i32 -> vector<8x512xf32>
    %87 = vector.extract_strided_slice %0 {offsets = [1, 0], sizes = [1, 512], strides = [1, 1]} : vector<9x512xf32> to vector<1x512xf32>
    %88 = vector.broadcast %87 : vector<1x512xf32> to vector<8x512xf32>
    %89 = arith.mulf %86, %88 : vector<8x512xf32>
    %c15_i32_35 = arith.constant 15 : i32
    %90 = tpu.dynamic_rotate %80 by %c15_i32_35 dim 1 : vector<8x512xf32>, i32 -> vector<8x512xf32>
    %91 = vector.extract_strided_slice %0 {offsets = [2, 0], sizes = [1, 512], strides = [1, 1]} : vector<9x512xf32> to vector<1x512xf32>
    %92 = vector.broadcast %91 : vector<1x512xf32> to vector<8x512xf32>
    %93 = arith.mulf %90, %92 : vector<8x512xf32>
    %c1_i32_36 = arith.constant 1 : i32
    %94 = tpu.dynamic_rotate %80 by %c1_i32_36 dim 1 : vector<8x512xf32>, i32 -> vector<8x512xf32>
    %95 = vector.extract_strided_slice %0 {offsets = [3, 0], sizes = [1, 512], strides = [1, 1]} : vector<9x512xf32> to vector<1x512xf32>
    %96 = vector.broadcast %95 : vector<1x512xf32> to vector<8x512xf32>
    %97 = arith.mulf %94, %96 : vector<8x512xf32>
    %c511_i32_37 = arith.constant 511 : i32
    %98 = tpu.dynamic_rotate %80 by %c511_i32_37 dim 1 : vector<8x512xf32>, i32 -> vector<8x512xf32>
    %99 = vector.extract_strided_slice %0 {offsets = [5, 0], sizes = [1, 512], strides = [1, 1]} : vector<9x512xf32> to vector<1x512xf32>
    %100 = vector.broadcast %99 : vector<1x512xf32> to vector<8x512xf32>
    %101 = arith.mulf %98, %100 : vector<8x512xf32>
    %c497_i32_38 = arith.constant 497 : i32
    %102 = tpu.dynamic_rotate %80 by %c497_i32_38 dim 1 : vector<8x512xf32>, i32 -> vector<8x512xf32>
    %103 = vector.extract_strided_slice %0 {offsets = [6, 0], sizes = [1, 512], strides = [1, 1]} : vector<9x512xf32> to vector<1x512xf32>
    %104 = vector.broadcast %103 : vector<1x512xf32> to vector<8x512xf32>
    %105 = arith.mulf %102, %104 : vector<8x512xf32>
    %c496_i32_39 = arith.constant 496 : i32
    %106 = tpu.dynamic_rotate %80 by %c496_i32_39 dim 1 : vector<8x512xf32>, i32 -> vector<8x512xf32>
    %107 = vector.extract_strided_slice %0 {offsets = [7, 0], sizes = [1, 512], strides = [1, 1]} : vector<9x512xf32> to vector<1x512xf32>
    %108 = vector.broadcast %107 : vector<1x512xf32> to vector<8x512xf32>
    %109 = arith.mulf %106, %108 : vector<8x512xf32>
    %c495_i32_40 = arith.constant 495 : i32
    %110 = tpu.dynamic_rotate %80 by %c495_i32_40 dim 1 : vector<8x512xf32>, i32 -> vector<8x512xf32>
    %111 = vector.extract_strided_slice %0 {offsets = [8, 0], sizes = [1, 512], strides = [1, 1]} : vector<9x512xf32> to vector<1x512xf32>
    %112 = vector.broadcast %111 : vector<1x512xf32> to vector<8x512xf32>
    %113 = arith.mulf %110, %112 : vector<8x512xf32>
    %114 = tpu.concatenate %85, %89, %93, %97, %80, %101, %105, %109, %113 in 0 : vector<8x512xf32>, vector<8x512xf32>, vector<8x512xf32>, vector<8x512xf32>, vector<8x512xf32>, vector<8x512xf32>, vector<8x512xf32>, vector<8x512xf32>, vector<8x512xf32> -> vector<72x512xf32>
    %cst_41 = arith.constant dense<0.000000e+00> : vector<4x512xf32>
    %115 = tpu.matmul %81, %114, %cst_41 {dimension_numbers = #tpu.dot_dimension_numbers<[1], [0], [0], [1], [0, 0, 1, 1], [], []>} : vector<4x72xf32>, vector<72x512xf32>, vector<4x512xf32> -> vector<4x512xf32>
    %116 = vector.extract_strided_slice %1 {offsets = [0, 3], sizes = [4, 1], strides = [1, 1]} : vector<8x5xf32> to vector<4x1xf32>
    %117 = vector.extract_strided_slice %1 {offsets = [0, 4], sizes = [4, 1], strides = [1, 1]} : vector<8x5xf32> to vector<4x1xf32>
    %cst_42 = arith.constant dense<0.000000e+00> : vector<4xf32>
    %118 = vector.multi_reduction <add>, %115, %cst_42 [1] : vector<4x512xf32> to vector<4xf32>
    %119 = vector.shape_cast %118 : vector<4xf32> to vector<4x1xf32>
    %cst_43 = arith.constant 0.001953125 : f32
    %120 = vector.broadcast %cst_43 : f32 to vector<4x1xf32>
    %121 = arith.mulf %119, %120 : vector<4x1xf32>
    %122 = vector.broadcast %121 : vector<4x1xf32> to vector<4x512xf32>
    %123 = arith.subf %115, %122 : vector<4x512xf32>
    %124 = arith.mulf %123, %123 : vector<4x512xf32>
    %cst_44 = arith.constant dense<0.000000e+00> : vector<4xf32>
    %125 = vector.multi_reduction <add>, %124, %cst_44 [1] : vector<4x512xf32> to vector<4xf32>
    %126 = vector.shape_cast %125 : vector<4xf32> to vector<4x1xf32>
    %cst_45 = arith.constant 0.001953125 : f32
    %127 = vector.broadcast %cst_45 : f32 to vector<4x1xf32>
    %128 = arith.mulf %126, %127 : vector<4x1xf32>
    %cst_46 = arith.constant 9.99999974E-6 : f32
    %129 = vector.broadcast %cst_46 : f32 to vector<4x1xf32>
    %130 = arith.addf %128, %129 : vector<4x1xf32>
    %131 = math.rsqrt %130 : vector<4x1xf32>
    %132 = arith.mulf %116, %131 : vector<4x1xf32>
    %133 = vector.broadcast %132 : vector<4x1xf32> to vector<4x512xf32>
    %134 = arith.mulf %123, %133 : vector<4x512xf32>
    %135 = vector.broadcast %117 : vector<4x1xf32> to vector<4x512xf32>
    %136 = arith.addf %134, %135 : vector<4x512xf32>
    %cst_47 = arith.constant 0.000000e+00 : f32
    %137 = vector.broadcast %cst_47 : f32 to vector<4x512xf32>
    %138 = arith.maximumf %136, %137 : vector<4x512xf32>
    %c0_48 = arith.constant 0 : index
    %c0_49 = arith.constant 0 : index
    %139 = vector.load %arg8[%c0_48, %c0_49] : memref<4x512xf32, #tpu.memory_space<vmem>>, vector<4x512xf32>
    tpu.vector_store %arg8[%c0_48, %c0_49], %138 {strides = array<i32>} : memref<4x512xf32, #tpu.memory_space<vmem>>, vector<4x512xf32>,
    return
  }
}

</mosaic_0001>

<llo_original>
// kernel: decoder_block_forward.1
$region0: #{decoder_block_forward.1}
  #allocation0 [shape = 'u32[]', space=smem, size = 0x4, offset = 0x4, fixed_abs, tag = 'smem constant byte address 0x4 - core index']
  #allocation1 [shape = 'u32[144,128]{1,0:T(1,128)}', space=vmem, size = 0x12000, scoped, tag = 'internal scratch']
  %s0 = inlined_call_operand.vmem [shape: f32[8,128], index: 0, kind: input, shape index: {}]
  %s1 = inlined_call_operand.vmem [shape: f32[8,512], index: 1, kind: input, shape index: {}]
  %s2 = inlined_call_operand.vmem [shape: f32[4,8,8], index: 2, kind: input, shape index: {}]
  %s3 = inlined_call_operand.hbm [shape: f32[512,512], index: 3, kind: input, shape index: {}]
  %s4 = inlined_call_operand.vmem [shape: f32[8,72], index: 4, kind: input, shape index: {}]
  %s5 = inlined_call_operand.vmem [shape: f32[4,72], index: 5, kind: input, shape index: {}]
  %s6 = inlined_call_operand.vmem [shape: f32[8,5], index: 6, kind: input, shape index: {}]
  %s7 = inlined_call_operand.vmem [shape: f32[9,512], index: 7, kind: input, shape index: {}]
  %s8 = inlined_call_operand.vmem [shape: f32[4,512], index: 8, kind: output, shape index: {}]
  %s9 = sld [smem:[#allocation0]]
  $region46: #{decoder_block_forward.1} parent=0
    _
  %s11 = ssub.s32 1, %s9
  %s12 = scalar_select 0, %s11, %s9
  $region1: #{decoder_block_forward.1} parent=0
    #allocation2 [shape = 'u8[1048576]{0}', space=vmem, size = 0x100000, scoped, tag = 'input window, operand 3, single buffered']
    #allocation3 [shape = 's32[1]{0}', space=sflag, size = 0x4, scoped, tag = 'scoped memory for decoder_block_forward.1']
    %13 = vsyncpa [#allocation3], 0
    // Predicated region
    $region2: #{decoder_block_forward.1} parent=1 // pred_check
      _
    $region3: #{decoder_block_forward.1} parent=1 // pred_check_branch
      %15 = sbr.rel (0) target = $region5
    $region4: #{decoder_block_forward.1} parent=1 // pred_region
      _
    $region5: #{decoder_block_forward.1} parent=1 // pred_fallthru
      _
    // Predicated region
    $region6: #{decoder_block_forward.1} parent=1 // pred_check
      _
    $region7: #{decoder_block_forward.1} parent=1 // pred_check_branch
      %17 = sbr.rel (0) target = $region9
    $region8: #{decoder_block_forward.1} parent=1 // pred_region
      _
    $region9: #{decoder_block_forward.1} parent=1 // pred_fallthru
      _
    // Predicated region
    $region10: #{decoder_block_forward.1} parent=1 // pred_check
      _
    $region11: #{decoder_block_forward.1} parent=1 // pred_check_branch
      %19 = sbr.rel (0) target = $region13
    $region12: #{decoder_block_forward.1} parent=1 // pred_region
      _
    $region13: #{decoder_block_forward.1} parent=1 // pred_fallthru
      _
    // Predicated region
    $region14: #{decoder_block_forward.1} parent=1 // pred_check
      _
    $region15: #{decoder_block_forward.1} parent=1 // pred_check_branch
      %21 = sbr.rel (0) target = $region17
    $region16: #{decoder_block_forward.1} parent=1 // pred_region
      %s23 = ssub.s32 32768, 32768
      %24 = vsyncadd [#allocation3], %s23
      %s25 = sshll.u32 [#allocation2], 4
      %s26 = int_to_ptr.vmem [resolvable:$true] %s25
      %31 = dma.hbm_to_vmem [thread:$0]  %s3, 32768, %s26, [#allocation3], 512, 512, 32
    $region17: #{decoder_block_forward.1} parent=1 // pred_fallthru
      _
    // Predicated region
    $region18: #{decoder_block_forward.1} parent=1 // pred_check
      _
    $region19: #{decoder_block_forward.1} parent=1 // pred_check_branch
      %33 = sbr.rel (0) target = $region21
    $region20: #{decoder_block_forward.1} parent=1 // pred_region
      _
    $region21: #{decoder_block_forward.1} parent=1 // pred_fallthru
      _
    // Predicated region
    $region22: #{decoder_block_forward.1} parent=1 // pred_check
      _
    $region23: #{decoder_block_forward.1} parent=1 // pred_check_branch
      %35 = sbr.rel (0) target = $region25
    $region24: #{decoder_block_forward.1} parent=1 // pred_region
      _
    $region25: #{decoder_block_forward.1} parent=1 // pred_fallthru
      _
    // Predicated region
    $region26: #{decoder_block_forward.1} parent=1 // pred_check
      _
    $region27: #{decoder_block_forward.1} parent=1 // pred_check_branch
      %37 = sbr.rel (0) target = $region29
    $region28: #{decoder_block_forward.1} parent=1 // pred_region
      _
    $region29: #{decoder_block_forward.1} parent=1 // pred_fallthru
      _
    // Predicated region
    $region30: #{decoder_block_forward.1} parent=1 // pred_check
      _
    $region31: #{decoder_block_forward.1} parent=1 // pred_check_branch
      %39 = sbr.rel (0) target = $region33
    $region32: #{decoder_block_forward.1} parent=1 // pred_region
      _
    $region33: #{decoder_block_forward.1} parent=1 // pred_fallthru
      _
    // Predicated region
    $region34: #{decoder_block_forward.1} parent=1 // pred_check
      _
    $region35: #{decoder_block_forward.1} parent=1 // pred_check_branch
      %41 = sbr.rel (0) target = $region37
    $region36: #{decoder_block_forward.1} parent=1 // pred_region
      %42 = dma.done [#allocation3], 32768
    $region37: #{decoder_block_forward.1} parent=1 // pred_fallthru
      _
    %v43 = vld [vmem:[%s7] sm:$0xff]
    %v44 = vld [vmem:[%s7 + $0x8] sm:$0xff]
    %v45 = vld [vmem:[%s7 + $0x10] sm:$0xff]
    %v46 = vld [vmem:[%s7 + $0x18] sm:$0xff]
    %v47 = vld [vmem:[%s7 + $0x20] sm:$0x1]
    %v48 = vld [vmem:[%s7 + $0x28] sm:$0x1]
    %v49 = vld [vmem:[%s7 + $0x30] sm:$0x1]
    %v50 = vld [vmem:[%s7 + $0x38] sm:$0x1]
    %v51 = vld [vmem:[%s6] sm:$0xff]
    %v52 = vld [vmem:[%s0] sm:$0xff]
    %v53 = vld [vmem:[%s2] sm:$0xff]
    %vm54 = vcmask 64512
    %v56 = vsel %vm54, %v53, 0
    %58 = vmatprep.subr.mxu0 0.0
    %59 = vmatpush1.msra.mxu0 %v52
    %60 = vmatprep.subr.mxu0 0.0
    %61 = vmatpush1.msra.mxu0 0.0
    %62 = vmatprep.subr.mxu0 0.0
    %63 = vmatpush1.msra.mxu0 0.0
    %64 = vmatprep.subr.mxu0 0.0
    %65 = vmatpush1.msra.mxu0 0.0
    %66 = vmatprep.subr.mxu0 0.0
    %67 = vmatpush1.msra.mxu0 0.0
    %68 = vmatprep.subr.mxu0 0.0
    %69 = vmatpush1.msra.mxu0 0.0
    %70 = vmatprep.subr.mxu0 0.0
    %71 = vmatpush1.msra.mxu0 0.0
    %72 = vmatprep.subr.mxu0 0.0
    %73 = vmatpush1.msra.mxu0 0.0
    %74 = vmatprep.subr.mxu0 0.0
    %75 = vmatpush1.msra.mxu0 0.0
    %76 = vmatprep.subr.mxu0 0.0
    %77 = vmatpush1.msra.mxu0 0.0
    %78 = vmatprep.subr.mxu0 0.0
    %79 = vmatpush1.msra.mxu0 0.0
    %80 = vmatprep.subr.mxu0 0.0
    %81 = vmatpush1.msra.mxu0 0.0
    %82 = vmatprep.subr.mxu0 0.0
    %83 = vmatpush1.msra.mxu0 0.0
    %84 = vmatprep.subr.mxu0 0.0
    %85 = vmatpush1.msra.mxu0 0.0
    %86 = vmatprep.subr.mxu0 0.0
    %87 = vmatpush1.msra.mxu0 0.0
    %88 = vmatprep.subr.mxu0 0.0
    %89 = vmatpush1.msra.mxu0 0.0
    %90 = vmatprep.subr.mxu0 0.0
    %91 = vmatpush1.msra.mxu0 0.0
    %92 = vmatprep.subr.mxu0 0.0
    %93 = vmatpush1.msra.mxu0 0.0
    %94 = vmatprep.subr.mxu0 0.0
    %95 = vmatpush1.msra.mxu0 0.0
    %96 = vmatprep.subr.mxu0 0.0
    %97 = vmatpush1.msra.mxu0 0.0
    %98 = vmatprep.subr.mxu0 0.0
    %99 = vmatpush1.msra.mxu0 0.0
    %100 = vmatprep.subr.mxu0 0.0
    %101 = vmatpush1.msra.mxu0 0.0
    %102 = vmatprep.subr.mxu0 0.0
    %103 = vmatpush1.msra.mxu0 0.0
    %104 = vmatprep.subr.mxu0 0.0
    %105 = vmatpush1.msra.mxu0 0.0
    %106 = vmatprep.subr.mxu0 0.0
    %107 = vmatpush1.msra.mxu0 0.0
    %108 = vmatprep.subr.mxu0 0.0
    %109 = vmatpush1.msra.mxu0 0.0
    %110 = vmatprep.subr.mxu0 0.0
    %111 = vmatpush1.msra.mxu0 0.0
    %112 = vmatprep.subr.mxu0 0.0
    %113 = vmatpush1.msra.mxu0 0.0
    %114 = vmatprep.subr.mxu0 0.0
    %115 = vmatpush1.msra.mxu0 0.0
    %116 = vmatprep.subr.mxu0 0.0
    %117 = vmatpush1.msra.mxu0 0.0
    %118 = vmatprep.subr.mxu0 0.0
    %119 = vmatpush1.msra.mxu0 0.0
    %120 = vmatprep.subr.mxu0 0.0
    %121 = vmatpush1.msra.mxu0 0.0
    %122 = vmatprep.mubr.f32.mxu0 0.0
    %123 = vmatmul.mubr.f32.gmra.mrb[0].mxu0 %v56
    %v124 = vpop.f32.mrb[0].mxu0
    %v125 = vadd.f32 0.0, %v124
    %v126 = vpop.f32.mrb[0].mxu0
    %127 = vdwg.mxu0
    %s128 = scalar_lea.vmem %s2, 8
    %v129 = vld [vmem:[%s128] sm:$0xff]
    %v131 = vsel %vm54, %v129, 0
    %133 = vmatprep.subr.mxu0 0.0
    %134 = vmatpush1.msra.mxu0 %v52
    %135 = vmatprep.subr.mxu0 0.0
    %136 = vmatpush1.msra.mxu0 0.0
    %137 = vmatprep.subr.mxu0 0.0
    %138 = vmatpush1.msra.mxu0 0.0
    %139 = vmatprep.subr.mxu0 0.0
    %140 = vmatpush1.msra.mxu0 0.0
    %141 = vmatprep.subr.mxu0 0.0
    %142 = vmatpush1.msra.mxu0 0.0
    %143 = vmatprep.subr.mxu0 0.0
    %144 = vmatpush1.msra.mxu0 0.0
    %145 = vmatprep.subr.mxu0 0.0
    %146 = vmatpush1.msra.mxu0 0.0
    %147 = vmatprep.subr.mxu0 0.0
    %148 = vmatpush1.msra.mxu0 0.0
    %149 = vmatprep.subr.mxu0 0.0
    %150 = vmatpush1.msra.mxu0 0.0
    %151 = vmatprep.subr.mxu0 0.0
    %152 = vmatpush1.msra.mxu0 0.0
    %153 = vmatprep.subr.mxu0 0.0
    %154 = vmatpush1.msra.mxu0 0.0
    %155 = vmatprep.subr.mxu0 0.0
    %156 = vmatpush1.msra.mxu0 0.0
    %157 = vmatprep.subr.mxu0 0.0
    %158 = vmatpush1.msra.mxu0 0.0
    %159 = vmatprep.subr.mxu0 0.0
    %160 = vmatpush1.msra.mxu0 0.0
    %161 = vmatprep.subr.mxu0 0.0
    %162 = vmatpush1.msra.mxu0 0.0
    %163 = vmatprep.subr.mxu0 0.0
    %164 = vmatpush1.msra.mxu0 0.0
    %165 = vmatprep.subr.mxu0 0.0
    %166 = vmatpush1.msra.mxu0 0.0
    %167 = vmatprep.subr.mxu0 0.0
    %168 = vmatpush1.msra.mxu0 0.0
    %169 = vmatprep.subr.mxu0 0.0
    %170 = vmatpush1.msra.mxu0 0.0
    %171 = vmatprep.subr.mxu0 0.0
    %172 = vmatpush1.msra.mxu0 0.0
    %173 = vmatprep.subr.mxu0 0.0
    %174 = vmatpush1.msra.mxu0 0.0
    %175 = vmatprep.subr.mxu0 0.0
    %176 = vmatpush1.msra.mxu0 0.0
    %177 = vmatprep.subr.mxu0 0.0
    %178 = vmatpush1.msra.mxu0 0.0
    %179 = vmatprep.subr.mxu0 0.0
    %180 = vmatpush1.msra.mxu0 0.0
    %181 = vmatprep.subr.mxu0 0.0
    %182 = vmatpush1.msra.mxu0 0.0
    %183 = vmatprep.subr.mxu0 0.0
    %184 = vmatpush1.msra.mxu0 0.0
    %185 = vmatprep.subr.mxu0 0.0
    %186 = vmatpush1.msra.mxu0 0.0
    %187 = vmatprep.subr.mxu0 0.0
    %188 = vmatpush1.msra.mxu0 0.0
    %189 = vmatprep.subr.mxu0 0.0
    %190 = vmatpush1.msra.mxu0 0.0
    %191 = vmatprep.subr.mxu0 0.0
    %192 = vmatpush1.msra.mxu0 0.0
    %193 = vmatprep.subr.mxu0 0.0
    %194 = vmatpush1.msra.mxu0 0.0
    %195 = vmatprep.subr.mxu0 0.0
    %196 = vmatpush1.msra.mxu0 0.0
    %197 = vmatprep.mubr.f32.mxu0 0.0
    %198 = vmatmul.mubr.f32.gmra.mrb[0].mxu0 %v131
    %v199 = vpop.f32.mrb[0].mxu0
    %v200 = vadd.f32 0.0, %v199
    %v201 = vpop.f32.mrb[0].mxu0
    %202 = vdwg.mxu0
    %s203 = scalar_lea.vmem %s2, 16
    %v204 = vld [vmem:[%s203] sm:$0xff]
    %v206 = vsel %vm54, %v204, 0
    %208 = vmatprep.subr.mxu0 0.0
    %209 = vmatpush1.msra.mxu0 %v52
    %210 = vmatprep.subr.mxu0 0.0
    %211 = vmatpush1.msra.mxu0 0.0
    %212 = vmatprep.subr.mxu0 0.0
    %213 = vmatpush1.msra.mxu0 0.0
    %214 = vmatprep.subr.mxu0 0.0
    %215 = vmatpush1.msra.mxu0 0.0
    %216 = vmatprep.subr.mxu0 0.0
    %217 = vmatpush1.msra.mxu0 0.0
    %218 = vmatprep.subr.mxu0 0.0
    %219 = vmatpush1.msra.mxu0 0.0
    %220 = vmatprep.subr.mxu0 0.0
    %221 = vmatpush1.msra.mxu0 0.0
    %222 = vmatprep.subr.mxu0 0.0
    %223 = vmatpush1.msra.mxu0 0.0
    %224 = vmatprep.subr.mxu0 0.0
    %225 = vmatpush1.msra.mxu0 0.0
    %226 = vmatprep.subr.mxu0 0.0
    %227 = vmatpush1.msra.mxu0 0.0
    %228 = vmatprep.subr.mxu0 0.0
    %229 = vmatpush1.msra.mxu0 0.0
    %230 = vmatprep.subr.mxu0 0.0
    %231 = vmatpush1.msra.mxu0 0.0
    %232 = vmatprep.subr.mxu0 0.0
    %233 = vmatpush1.msra.mxu0 0.0
    %234 = vmatprep.subr.mxu0 0.0
    %235 = vmatpush1.msra.mxu0 0.0
    %236 = vmatprep.subr.mxu0 0.0
    %237 = vmatpush1.msra.mxu0 0.0
    %238 = vmatprep.subr.mxu0 0.0
    %239 = vmatpush1.msra.mxu0 0.0
    %240 = vmatprep.subr.mxu0 0.0
    %241 = vmatpush1.msra.mxu0 0.0
    %242 = vmatprep.subr.mxu0 0.0
    %243 = vmatpush1.msra.mxu0 0.0
    %244 = vmatprep.subr.mxu0 0.0
    %245 = vmatpush1.msra.mxu0 0.0
    %246 = vmatprep.subr.mxu0 0.0
    %247 = vmatpush1.msra.mxu0 0.0
    %248 = vmatprep.subr.mxu0 0.0
    %249 = vmatpush1.msra.mxu0 0.0
    %250 = vmatprep.subr.mxu0 0.0
    %251 = vmatpush1.msra.mxu0 0.0
    %252 = vmatprep.subr.mxu0 0.0
    %253 = vmatpush1.msra.mxu0 0.0
    %254 = vmatprep.subr.mxu0 0.0
    %255 = vmatpush1.msra.mxu0 0.0
    %256 = vmatprep.subr.mxu0 0.0
    %257 = vmatpush1.msra.mxu0 0.0
    %258 = vmatprep.subr.mxu0 0.0
    %259 = vmatpush1.msra.mxu0 0.0
    %260 = vmatprep.subr.mxu0 0.0
    %261 = vmatpush1.msra.mxu0 0.0
    %262 = vmatprep.subr.mxu0 0.0
    %263 = vmatpush1.msra.mxu0 0.0
    %264 = vmatprep.subr.mxu0 0.0
    %265 = vmatpush1.msra.mxu0 0.0
    %266 = vmatprep.subr.mxu0 0.0
    %267 = vmatpush1.msra.mxu0 0.0
    %268 = vmatprep.subr.mxu0 0.0
    %269 = vmatpush1.msra.mxu0 0.0
    %270 = vmatprep.subr.mxu0 0.0
    %271 = vmatpush1.msra.mxu0 0.0
    %272 = vmatprep.mubr.f32.mxu0 0.0
    %273 = vmatmul.mubr.f32.gmra.mrb[0].mxu0 %v206
    %v274 = vpop.f32.mrb[0].mxu0
    %v275 = vadd.f32 0.0, %v274
    %v276 = vpop.f32.mrb[0].mxu0
    %277 = vdwg.mxu0
    %s278 = scalar_lea.vmem %s2, 24
    %v279 = vld [vmem:[%s278] sm:$0xff]
    %v281 = vsel %vm54, %v279, 0
    %283 = vmatprep.subr.mxu0 0.0
    %284 = vmatpush1.msra.mxu0 %v52
    %285 = vmatprep.subr.mxu0 0.0
    %286 = vmatpush1.msra.mxu0 0.0
    %287 = vmatprep.subr.mxu0 0.0
    %288 = vmatpush1.msra.mxu0 0.0
    %289 = vmatprep.subr.mxu0 0.0
    %290 = vmatpush1.msra.mxu0 0.0
    %291 = vmatprep.subr.mxu0 0.0
    %292 = vmatpush1.msra.mxu0 0.0
    %293 = vmatprep.subr.mxu0 0.0
    %294 = vmatpush1.msra.mxu0 0.0
    %295 = vmatprep.subr.mxu0 0.0
    %296 = vmatpush1.msra.mxu0 0.0
    %297 = vmatprep.subr.mxu0 0.0
    %298 = vmatpush1.msra.mxu0 0.0
    %299 = vmatprep.subr.mxu0 0.0
    %300 = vmatpush1.msra.mxu0 0.0
    %301 = vmatprep.subr.mxu0 0.0
    %302 = vmatpush1.msra.mxu0 0.0
    %303 = vmatprep.subr.mxu0 0.0
    %304 = vmatpush1.msra.mxu0 0.0
    %305 = vmatprep.subr.mxu0 0.0
    %306 = vmatpush1.msra.mxu0 0.0
    %307 = vmatprep.subr.mxu0 0.0
    %308 = vmatpush1.msra.mxu0 0.0
    %309 = vmatprep.subr.mxu0 0.0
    %310 = vmatpush1.msra.mxu0 0.0
    %311 = vmatprep.subr.mxu0 0.0
    %312 = vmatpush1.msra.mxu0 0.0
    %313 = vmatprep.subr.mxu0 0.0
    %314 = vmatpush1.msra.mxu0 0.0
    %315 = vmatprep.subr.mxu0 0.0
    %316 = vmatpush1.msra.mxu0 0.0
    %317 = vmatprep.subr.mxu0 0.0
    %318 = vmatpush1.msra.mxu0 0.0
    %319 = vmatprep.subr.mxu0 0.0
    %320 = vmatpush1.msra.mxu0 0.0
    %321 = vmatprep.subr.mxu0 0.0
    %322 = vmatpush1.msra.mxu0 0.0
    %323 = vmatprep.subr.mxu0 0.0
    %324 = vmatpush1.msra.mxu0 0.0
    %325 = vmatprep.subr.mxu0 0.0
    %326 = vmatpush1.msra.mxu0 0.0
    %327 = vmatprep.subr.mxu0 0.0
    %328 = vmatpush1.msra.mxu0 0.0
    %329 = vmatprep.subr.mxu0 0.0
    %330 = vmatpush1.msra.mxu0 0.0
    %331 = vmatprep.subr.mxu0 0.0
    %332 = vmatpush1.msra.mxu0 0.0
    %333 = vmatprep.subr.mxu0 0.0
    %334 = vmatpush1.msra.mxu0 0.0
    %335 = vmatprep.subr.mxu0 0.0
    %336 = vmatpush1.msra.mxu0 0.0
    %337 = vmatprep.subr.mxu0 0.0
    %338 = vmatpush1.msra.mxu0 0.0
    %339 = vmatprep.subr.mxu0 0.0
    %340 = vmatpush1.msra.mxu0 0.0
    %341 = vmatprep.subr.mxu0 0.0
    %342 = vmatpush1.msra.mxu0 0.0
    %343 = vmatprep.subr.mxu0 0.0
    %344 = vmatpush1.msra.mxu0 0.0
    %345 = vmatprep.subr.mxu0 0.0
    %346 = vmatpush1.msra.mxu0 0.0
    %347 = vmatprep.mubr.f32.mxu0 0.0
    %348 = vmatmul.mubr.f32.gmra.mrb[0].mxu0 %v281
    %v349 = vpop.f32.mrb[0].mxu0
    %v350 = vadd.f32 0.0, %v349
    %v351 = vpop.f32.mrb[0].mxu0
    %352 = vdwg.mxu0
    %v353 = vld [vmem:[#allocation2] sm:$0xff]
    %v354 = vld [vmem:[#allocation2 + $0x8] sm:$0xff]
    %v355 = vld [vmem:[#allocation2 + $0x10] sm:$0xff]
    %v356 = vld [vmem:[#allocation2 + $0x18] sm:$0xff]
    %v357 = vld [vmem:[#allocation2 + $0x20] sm:$0xff]
    %v358 = vld [vmem:[#allocation2 + $0x28] sm:$0xff]
    %v359 = vld [vmem:[#allocation2 + $0x30] sm:$0xff]
    %v360 = vld [vmem:[#allocation2 + $0x38] sm:$0xff]
    %v361 = vld [vmem:[#allocation2 + $0x40] sm:$0xff]
    %v362 = vld [vmem:[#allocation2 + $0x48] sm:$0xff]
    %v363 = vld [vmem:[#allocation2 + $0x50] sm:$0xff]
    %v364 = vld [vmem:[#allocation2 + $0x58] sm:$0xff]
    %v365 = vld [vmem:[#allocation2 + $0x60] sm:$0xff]
    %v366 = vld [vmem:[#allocation2 + $0x68] sm:$0xff]
    %v367 = vld [vmem:[#allocation2 + $0x70] sm:$0xff]
    %v368 = vld [vmem:[#allocation2 + $0x78] sm:$0xff]
    %v369 = vld [vmem:[#allocation2 + $0x80] sm:$0xff]
    %v370 = vld [vmem:[#allocation2 + $0x88] sm:$0xff]
    %v371 = vld [vmem:[#allocation2 + $0x90] sm:$0xff]
    %v372 = vld [vmem:[#allocation2 + $0x98] sm:$0xff]
    %v373 = vld [vmem:[#allocation2 + $0xa0] sm:$0xff]
    %v374 = vld [vmem:[#allocation2 + $0xa8] sm:$0xff]
    %v375 = vld [vmem:[#allocation2 + $0xb0] sm:$0xff]
    %v376 = vld [vmem:[#allocation2 + $0xb8] sm:$0xff]
    %v377 = vld [vmem:[#allocation2 + $0xc0] sm:$0xff]
    %v378 = vld [vmem:[#allocation2 + $0xc8] sm:$0xff]
    %v379 = vld [vmem:[#allocation2 + $0xd0] sm:$0xff]
    %v380 = vld [vmem:[#allocation2 + $0xd8] sm:$0xff]
    %v381 = vld [vmem:[#allocation2 + $0xe0] sm:$0xff]
    %v382 = vld [vmem:[#allocation2 + $0xe8] sm:$0xff]
    %v383 = vld [vmem:[#allocation2 + $0xf0] sm:$0xff]
    %v384 = vld [vmem:[#allocation2 + $0xf8] sm:$0xff]
    %v385 = vld [vmem:[#allocation2 + $0x100] sm:$0xff]
    %v386 = vld [vmem:[#allocation2 + $0x108] sm:$0xff]
    %v387 = vld [vmem:[#allocation2 + $0x110] sm:$0xff]
    %v388 = vld [vmem:[#allocation2 + $0x118] sm:$0xff]
    %v389 = vld [vmem:[#allocation2 + $0x120] sm:$0xff]
    %v390 = vld [vmem:[#allocation2 + $0x128] sm:$0xff]
    %v391 = vld [vmem:[#allocation2 + $0x130] sm:$0xff]
    %v392 = vld [vmem:[#allocation2 + $0x138] sm:$0xff]
    %v393 = vld [vmem:[#allocation2 + $0x140] sm:$0xff]
    %v394 = vld [vmem:[#allocation2 + $0x148] sm:$0xff]
    %v395 = vld [vmem:[#allocation2 + $0x150] sm:$0xff]
    %v396 = vld [vmem:[#allocation2 + $0x158] sm:$0xff]
    %v397 = vld [vmem:[#allocation2 + $0x160] sm:$0xff]
    %v398 = vld [vmem:[#allocation2 + $0x168] sm:$0xff]
    %v399 = vld [vmem:[#allocation2 + $0x170] sm:$0xff]
    %v400 = vld [vmem:[#allocation2 + $0x178] sm:$0xff]
    %v401 = vld [vmem:[#allocation2 + $0x180] sm:$0xff]
    %v402 = vld [vmem:[#allocation2 + $0x188] sm:$0xff]
    %v403 = vld [vmem:[#allocation2 + $0x190] sm:$0xff]
    %v404 = vld [vmem:[#allocation2 + $0x198] sm:$0xff]
    %v405 = vld [vmem:[#allocation2 + $0x1a0] sm:$0xff]
    %v406 = vld [vmem:[#allocation2 + $0x1a8] sm:$0xff]
    %v407 = vld [vmem:[#allocation2 + $0x1b0] sm:$0xff]
    %v408 = vld [vmem:[#allocation2 + $0x1b8] sm:$0xff]
    %v409 = vld [vmem:[#allocation2 + $0x1c0] sm:$0xff]
    %v410 = vld [vmem:[#allocation2 + $0x1c8] sm:$0xff]
    %v411 = vld [vmem:[#allocation2 + $0x1d0] sm:$0xff]
    %v412 = vld [vmem:[#allocation2 + $0x1d8] sm:$0xff]
    %v413 = vld [vmem:[#allocation2 + $0x1e0] sm:$0xff]
    %v414 = vld [vmem:[#allocation2 + $0x1e8] sm:$0xff]
    %v415 = vld [vmem:[#allocation2 + $0x1f0] sm:$0xff]
    %v416 = vld [vmem:[#allocation2 + $0x1f8] sm:$0xff]
    %v417 = vld [vmem:[#allocation2 + $0x200] sm:$0xff]
    %v418 = vld [vmem:[#allocation2 + $0x208] sm:$0xff]
    %v419 = vld [vmem:[#allocation2 + $0x210] sm:$0xff]
    %v420 = vld [vmem:[#allocation2 + $0x218] sm:$0xff]
    %v421 = vld [vmem:[#allocation2 + $0x220] sm:$0xff]
    %v422 = vld [vmem:[#allocation2 + $0x228] sm:$0xff]
    %v423 = vld [vmem:[#allocation2 + $0x230] sm:$0xff]
    %v424 = vld [vmem:[#allocation2 + $0x238] sm:$0xff]
    %v425 = vld [vmem:[#allocation2 + $0x240] sm:$0xff]
    %v426 = vld [vmem:[#allocation2 + $0x248] sm:$0xff]
    %v427 = vld [vmem:[#allocation2 + $0x250] sm:$0xff]
    %v428 = vld [vmem:[#allocation2 + $0x258] sm:$0xff]
    %v429 = vld [vmem:[#allocation2 + $0x260] sm:$0xff]
    %v430 = vld [vmem:[#allocation2 + $0x268] sm:$0xff]
    %v431 = vld [vmem:[#allocation2 + $0x270] sm:$0xff]
    %v432 = vld [vmem:[#allocation2 + $0x278] sm:$0xff]
    %v433 = vld [vmem:[#allocation2 + $0x280] sm:$0xff]
    %v434 = vld [vmem:[#allocation2 + $0x288] sm:$0xff]
    %v435 = vld [vmem:[#allocation2 + $0x290] sm:$0xff]
    %v436 = vld [vmem:[#allocation2 + $0x298] sm:$0xff]
    %v437 = vld [vmem:[#allocation2 + $0x2a0] sm:$0xff]
    %v438 = vld [vmem:[#allocation2 + $0x2a8] sm:$0xff]
    %v439 = vld [vmem:[#allocation2 + $0x2b0] sm:$0xff]
    %v440 = vld [vmem:[#allocation2 + $0x2b8] sm:$0xff]
    %v441 = vld [vmem:[#allocation2 + $0x2c0] sm:$0xff]
    %v442 = vld [vmem:[#allocation2 + $0x2c8] sm:$0xff]
    %v443 = vld [vmem:[#allocation2 + $0x2d0] sm:$0xff]
    %v444 = vld [vmem:[#allocation2 + $0x2d8] sm:$0xff]
    %v445 = vld [vmem:[#allocation2 + $0x2e0] sm:$0xff]
    %v446 = vld [vmem:[#allocation2 + $0x2e8] sm:$0xff]
    %v447 = vld [vmem:[#allocation2 + $0x2f0] sm:$0xff]
    %v448 = vld [vmem:[#allocation2 + $0x2f8] sm:$0xff]
    %v449 = vld [vmem:[#allocation2 + $0x300] sm:$0xff]
    %v450 = vld [vmem:[#allocation2 + $0x308] sm:$0xff]
    %v451 = vld [vmem:[#allocation2 + $0x310] sm:$0xff]
    %v452 = vld [vmem:[#allocation2 + $0x318] sm:$0xff]
    %v453 = vld [vmem:[#allocation2 + $0x320] sm:$0xff]
    %v454 = vld [vmem:[#allocation2 + $0x328] sm:$0xff]
    %v455 = vld [vmem:[#allocation2 + $0x330] sm:$0xff]
    %v456 = vld [vmem:[#allocation2 + $0x338] sm:$0xff]
    %v457 = vld [vmem:[#allocation2 + $0x340] sm:$0xff]
    %v458 = vld [vmem:[#allocation2 + $0x348] sm:$0xff]
    %v459 = vld [vmem:[#allocation2 + $0x350] sm:$0xff]
    %v460 = vld [vmem:[#allocation2 + $0x358] sm:$0xff]
    %v461 = vld [vmem:[#allocation2 + $0x360] sm:$0xff]
    %v462 = vld [vmem:[#allocation2 + $0x368] sm:$0xff]
    %v463 = vld [vmem:[#allocation2 + $0x370] sm:$0xff]
    %v464 = vld [vmem:[#allocation2 + $0x378] sm:$0xff]
    %v465 = vld [vmem:[#allocation2 + $0x380] sm:$0xff]
    %v466 = vld [vmem:[#allocation2 + $0x388] sm:$0xff]
    %v467 = vld [vmem:[#allocation2 + $0x390] sm:$0xff]
    %v468 = vld [vmem:[#allocation2 + $0x398] sm:$0xff]
    %v469 = vld [vmem:[#allocation2 + $0x3a0] sm:$0xff]
    %v470 = vld [vmem:[#allocation2 + $0x3a8] sm:$0xff]
    %v471 = vld [vmem:[#allocation2 + $0x3b0] sm:$0xff]
    %v472 = vld [vmem:[#allocation2 + $0x3b8] sm:$0xff]
    %v473 = vld [vmem:[#allocation2 + $0x3c0] sm:$0xff]
    %v474 = vld [vmem:[#allocation2 + $0x3c8] sm:$0xff]
    %v475 = vld [vmem:[#allocation2 + $0x3d0] sm:$0xff]
    %v476 = vld [vmem:[#allocation2 + $0x3d8] sm:$0xff]
    %v477 = vld [vmem:[#allocation2 + $0x3e0] sm:$0xff]
    %v478 = vld [vmem:[#allocation2 + $0x3e8] sm:$0xff]
    %v479 = vld [vmem:[#allocation2 + $0x3f0] sm:$0xff]
    %v480 = vld [vmem:[#allocation2 + $0x3f8] sm:$0xff]
    %v481 = vld [vmem:[#allocation2 + $0x400] sm:$0xff]
    %v482 = vld [vmem:[#allocation2 + $0x408] sm:$0xff]
    %v483 = vld [vmem:[#allocation2 + $0x410] sm:$0xff]
    %v484 = vld [vmem:[#allocation2 + $0x418] sm:$0xff]
    %v485 = vld [vmem:[#allocation2 + $0x420] sm:$0xff]
    %v486 = vld [vmem:[#allocation2 + $0x428] sm:$0xff]
    %v487 = vld [vmem:[#allocation2 + $0x430] sm:$0xff]
    %v488 = vld [vmem:[#allocation2 + $0x438] sm:$0xff]
    %v489 = vld [vmem:[#allocation2 + $0x440] sm:$0xff]
    %v490 = vld [vmem:[#allocation2 + $0x448] sm:$0xff]
    %v491 = vld [vmem:[#allocation2 + $0x450] sm:$0xff]
    %v492 = vld [vmem:[#allocation2 + $0x458] sm:$0xff]
    %v493 = vld [vmem:[#allocation2 + $0x460] sm:$0xff]
    %v494 = vld [vmem:[#allocation2 + $0x468] sm:$0xff]
    %v495 = vld [vmem:[#allocation2 + $0x470] sm:$0xff]
    %v496 = vld [vmem:[#allocation2 + $0x478] sm:$0xff]
    %v497 = vld [vmem:[#allocation2 + $0x480] sm:$0xff]
    %v498 = vld [vmem:[#allocation2 + $0x488] sm:$0xff]
    %v499 = vld [vmem:[#allocation2 + $0x490] sm:$0xff]
    %v500 = vld [vmem:[#allocation2 + $0x498] sm:$0xff]
    %v501 = vld [vmem:[#allocation2 + $0x4a0] sm:$0xff]
    %v502 = vld [vmem:[#allocation2 + $0x4a8] sm:$0xff]
    %v503 = vld [vmem:[#allocation2 + $0x4b0] sm:$0xff]
    %v504 = vld [vmem:[#allocation2 + $0x4b8] sm:$0xff]
    %v505 = vld [vmem:[#allocation2 + $0x4c0] sm:$0xff]
    %v506 = vld [vmem:[#allocation2 + $0x4c8] sm:$0xff]
    %v507 = vld [vmem:[#allocation2 + $0x4d0] sm:$0xff]
    %v508 = vld [vmem:[#allocation2 + $0x4d8] sm:$0xff]
    %v509 = vld [vmem:[#allocation2 + $0x4e0] sm:$0xff]
    %v510 = vld [vmem:[#allocation2 + $0x4e8] sm:$0xff]
    %v511 = vld [vmem:[#allocation2 + $0x4f0] sm:$0xff]
    %v512 = vld [vmem:[#allocation2 + $0x4f8] sm:$0xff]
    %v513 = vld [vmem:[#allocation2 + $0x500] sm:$0xff]
    %v514 = vld [vmem:[#allocation2 + $0x508] sm:$0xff]
    %v515 = vld [vmem:[#allocation2 + $0x510] sm:$0xff]
    %v516 = vld [vmem:[#allocation2 + $0x518] sm:$0xff]
    %v517 = vld [vmem:[#allocation2 + $0x520] sm:$0xff]
    %v518 = vld [vmem:[#allocation2 + $0x528] sm:$0xff]
    %v519 = vld [vmem:[#allocation2 + $0x530] sm:$0xff]
    %v520 = vld [vmem:[#allocation2 + $0x538] sm:$0xff]
    %v521 = vld [vmem:[#allocation2 + $0x540] sm:$0xff]
    %v522 = vld [vmem:[#allocation2 + $0x548] sm:$0xff]
    %v523 = vld [vmem:[#allocation2 + $0x550] sm:$0xff]
    %v524 = vld [vmem:[#allocation2 + $0x558] sm:$0xff]
    %v525 = vld [vmem:[#allocation2 + $0x560] sm:$0xff]
    %v526 = vld [vmem:[#allocation2 + $0x568] sm:$0xff]
    %v527 = vld [vmem:[#allocation2 + $0x570] sm:$0xff]
    %v528 = vld [vmem:[#allocation2 + $0x578] sm:$0xff]
    %v529 = vld [vmem:[#allocation2 + $0x580] sm:$0xff]
    %v530 = vld [vmem:[#allocation2 + $0x588] sm:$0xff]
    %v531 = vld [vmem:[#allocation2 + $0x590] sm:$0xff]
    %v532 = vld [vmem:[#allocation2 + $0x598] sm:$0xff]
    %v533 = vld [vmem:[#allocation2 + $0x5a0] sm:$0xff]
    %v534 = vld [vmem:[#allocation2 + $0x5a8] sm:$0xff]
    %v535 = vld [vmem:[#allocation2 + $0x5b0] sm:$0xff]
    %v536 = vld [vmem:[#allocation2 + $0x5b8] sm:$0xff]
    %v537 = vld [vmem:[#allocation2 + $0x5c0] sm:$0xff]
    %v538 = vld [vmem:[#allocation2 + $0x5c8] sm:$0xff]
    %v539 = vld [vmem:[#allocation2 + $0x5d0] sm:$0xff]
    %v540 = vld [vmem:[#allocation2 + $0x5d8] sm:$0xff]
    %v541 = vld [vmem:[#allocation2 + $0x5e0] sm:$0xff]
    %v542 = vld [vmem:[#allocation2 + $0x5e8] sm:$0xff]
    %v543 = vld [vmem:[#allocation2 + $0x5f0] sm:$0xff]
    %v544 = vld [vmem:[#allocation2 + $0x5f8] sm:$0xff]
    %v545 = vld [vmem:[#allocation2 + $0x600] sm:$0xff]
    %v546 = vld [vmem:[#allocation2 + $0x608] sm:$0xff]
    %v547 = vld [vmem:[#allocation2 + $0x610] sm:$0xff]
    %v548 = vld [vmem:[#allocation2 + $0x618] sm:$0xff]
    %v549 = vld [vmem:[#allocation2 + $0x620] sm:$0xff]
    %v550 = vld [vmem:[#allocation2 + $0x628] sm:$0xff]
    %v551 = vld [vmem:[#allocation2 + $0x630] sm:$0xff]
    %v552 = vld [vmem:[#allocation2 + $0x638] sm:$0xff]
    %v553 = vld [vmem:[#allocation2 + $0x640] sm:$0xff]
    %v554 = vld [vmem:[#allocation2 + $0x648] sm:$0xff]
    %v555 = vld [vmem:[#allocation2 + $0x650] sm:$0xff]
    %v556 = vld [vmem:[#allocation2 + $0x658] sm:$0xff]
    %v557 = vld [vmem:[#allocation2 + $0x660] sm:$0xff]
    %v558 = vld [vmem:[#allocation2 + $0x668] sm:$0xff]
    %v559 = vld [vmem:[#allocation2 + $0x670] sm:$0xff]
    %v560 = vld [vmem:[#allocation2 + $0x678] sm:$0xff]
    %v561 = vld [vmem:[#allocation2 + $0x680] sm:$0xff]
    %v562 = vld [vmem:[#allocation2 + $0x688] sm:$0xff]
    %v563 = vld [vmem:[#allocation2 + $0x690] sm:$0xff]
    %v564 = vld [vmem:[#allocation2 + $0x698] sm:$0xff]
    %v565 = vld [vmem:[#allocation2 + $0x6a0] sm:$0xff]
    %v566 = vld [vmem:[#allocation2 + $0x6a8] sm:$0xff]
    %v567 = vld [vmem:[#allocation2 + $0x6b0] sm:$0xff]
    %v568 = vld [vmem:[#allocation2 + $0x6b8] sm:$0xff]
    %v569 = vld [vmem:[#allocation2 + $0x6c0] sm:$0xff]
    %v570 = vld [vmem:[#allocation2 + $0x6c8] sm:$0xff]
    %v571 = vld [vmem:[#allocation2 + $0x6d0] sm:$0xff]
    %v572 = vld [vmem:[#allocation2 + $0x6d8] sm:$0xff]
    %v573 = vld [vmem:[#allocation2 + $0x6e0] sm:$0xff]
    %v574 = vld [vmem:[#allocation2 + $0x6e8] sm:$0xff]
    %v575 = vld [vmem:[#allocation2 + $0x6f0] sm:$0xff]
    %v576 = vld [vmem:[#allocation2 + $0x6f8] sm:$0xff]
    %v577 = vld [vmem:[#allocation2 + $0x700] sm:$0xff]
    %v578 = vld [vmem:[#allocation2 + $0x708] sm:$0xff]
    %v579 = vld [vmem:[#allocation2 + $0x710] sm:$0xff]
    %v580 = vld [vmem:[#allocation2 + $0x718] sm:$0xff]
    %v581 = vld [vmem:[#allocation2 + $0x720] sm:$0xff]
    %v582 = vld [vmem:[#allocation2 + $0x728] sm:$0xff]
    %v583 = vld [vmem:[#allocation2 + $0x730] sm:$0xff]
    %v584 = vld [vmem:[#allocation2 + $0x738] sm:$0xff]
    %v585 = vld [vmem:[#allocation2 + $0x740] sm:$0xff]
    %v586 = vld [vmem:[#allocation2 + $0x748] sm:$0xff]
    %v587 = vld [vmem:[#allocation2 + $0x750] sm:$0xff]
    %v588 = vld [vmem:[#allocation2 + $0x758] sm:$0xff]
    %v589 = vld [vmem:[#allocation2 + $0x760] sm:$0xff]
    %v590 = vld [vmem:[#allocation2 + $0x768] sm:$0xff]
    %v591 = vld [vmem:[#allocation2 + $0x770] sm:$0xff]
    %v592 = vld [vmem:[#allocation2 + $0x778] sm:$0xff]
    %v593 = vld [vmem:[#allocation2 + $0x780] sm:$0xff]
    %v594 = vld [vmem:[#allocation2 + $0x788] sm:$0xff]
    %v595 = vld [vmem:[#allocation2 + $0x790] sm:$0xff]
    %v596 = vld [vmem:[#allocation2 + $0x798] sm:$0xff]
    %v597 = vld [vmem:[#allocation2 + $0x7a0] sm:$0xff]
    %v598 = vld [vmem:[#allocation2 + $0x7a8] sm:$0xff]
    %v599 = vld [vmem:[#allocation2 + $0x7b0] sm:$0xff]
    %v600 = vld [vmem:[#allocation2 + $0x7b8] sm:$0xff]
    %v601 = vld [vmem:[#allocation2 + $0x7c0] sm:$0xff]
    %v602 = vld [vmem:[#allocation2 + $0x7c8] sm:$0xff]
    %v603 = vld [vmem:[#allocation2 + $0x7d0] sm:$0xff]
    %v604 = vld [vmem:[#allocation2 + $0x7d8] sm:$0xff]
    %v605 = vld [vmem:[#allocation2 + $0x7e0] sm:$0xff]
    %v606 = vld [vmem:[#allocation2 + $0x7e8] sm:$0xff]
    %v607 = vld [vmem:[#allocation2 + $0x7f0] sm:$0xff]
    %v608 = vld [vmem:[#allocation2 + $0x7f8] sm:$0xff]
    %610 = vset.pattern.permute.xlu0 0
    %611 = vperm.xlu0 %610, %v51
    %v612 = vpop.permute.xlu0 %611
    %614 = vmatprep.subr.mxu0 %v354
    %615 = vmatpush1.msra.mxu0 %v353
    %616 = vmatprep.subr.mxu0 %v358
    %617 = vmatpush1.msra.mxu0 %v357
    %618 = vmatprep.subr.mxu0 %v362
    %619 = vmatpush1.msra.mxu0 %v361
    %620 = vmatprep.subr.mxu0 %v366
    %621 = vmatpush1.msra.mxu0 %v365
    %622 = vmatprep.subr.mxu0 %v370
    %623 = vmatpush1.msra.mxu0 %v369
    %624 = vmatprep.subr.mxu0 %v374
    %625 = vmatpush1.msra.mxu0 %v373
    %626 = vmatprep.subr.mxu0 %v378
    %627 = vmatpush1.msra.mxu0 %v377
    %628 = vmatprep.subr.mxu0 %v382
    %629 = vmatpush1.msra.mxu0 %v381
    %630 = vmatprep.subr.mxu0 %v386
    %631 = vmatpush1.msra.mxu0 %v385
    %632 = vmatprep.subr.mxu0 %v390
    %633 = vmatpush1.msra.mxu0 %v389
    %634 = vmatprep.subr.mxu0 %v394
    %635 = vmatpush1.msra.mxu0 %v393
    %636 = vmatprep.subr.mxu0 %v398
    %637 = vmatpush1.msra.mxu0 %v397
    %638 = vmatprep.subr.mxu0 %v402
    %639 = vmatpush1.msra.mxu0 %v401
    %640 = vmatprep.subr.mxu0 %v406
    %641 = vmatpush1.msra.mxu0 %v405
    %642 = vmatprep.subr.mxu0 %v410
    %643 = vmatpush1.msra.mxu0 %v409
    %644 = vmatprep.subr.mxu0 %v414
    %645 = vmatpush1.msra.mxu0 %v413
    %646 = vmatprep.subr.mxu0 %v418
    %647 = vmatpush1.msra.mxu0 %v417
    %648 = vmatprep.subr.mxu0 %v422
    %649 = vmatpush1.msra.mxu0 %v421
    %650 = vmatprep.subr.mxu0 %v426
    %651 = vmatpush1.msra.mxu0 %v425
    %652 = vmatprep.subr.mxu0 %v430
    %653 = vmatpush1.msra.mxu0 %v429
    %654 = vmatprep.subr.mxu0 %v434
    %655 = vmatpush1.msra.mxu0 %v433
    %656 = vmatprep.subr.mxu0 %v438
    %657 = vmatpush1.msra.mxu0 %v437
    %658 = vmatprep.subr.mxu0 %v442
    %659 = vmatpush1.msra.mxu0 %v441
    %660 = vmatprep.subr.mxu0 %v446
    %661 = vmatpush1.msra.mxu0 %v445
    %662 = vmatprep.subr.mxu0 %v450
    %663 = vmatpush1.msra.mxu0 %v449
    %664 = vmatprep.subr.mxu0 %v454
    %665 = vmatpush1.msra.mxu0 %v453
    %666 = vmatprep.subr.mxu0 %v458
    %667 = vmatpush1.msra.mxu0 %v457
    %668 = vmatprep.subr.mxu0 %v462
    %669 = vmatpush1.msra.mxu0 %v461
    %670 = vmatprep.subr.mxu0 %v466
    %671 = vmatpush1.msra.mxu0 %v465
    %672 = vmatprep.subr.mxu0 %v470
    %673 = vmatpush1.msra.mxu0 %v469
    %674 = vmatprep.subr.mxu0 %v474
    %675 = vmatpush1.msra.mxu0 %v473
    %676 = vmatprep.subr.mxu0 %v478
    %677 = vmatpush1.msra.mxu0 %v477
    %678 = vmatprep.mubr.f32.mxu0 %v200
    %679 = vmatmul.mubr.f32.gmra.mrb[0].mxu0 %v125
    %v680 = vpop.f32.mrb[0].mxu0
    %v681 = vadd.f32 %v612, %v680
    %v682 = vpop.f32.mrb[0].mxu0
    %v683 = vadd.f32 %v612, %v682
    %684 = vdwg.mxu0
    %685 = vmatprep.subr.mxu0 %v482
    %686 = vmatpush1.msra.mxu0 %v481
    %687 = vmatprep.subr.mxu0 %v486
    %688 = vmatpush1.msra.mxu0 %v485
    %689 = vmatprep.subr.mxu0 %v490
    %690 = vmatpush1.msra.mxu0 %v489
    %691 = vmatprep.subr.mxu0 %v494
    %692 = vmatpush1.msra.mxu0 %v493
    %693 = vmatprep.subr.mxu0 %v498
    %694 = vmatpush1.msra.mxu0 %v497
    %695 = vmatprep.subr.mxu0 %v502
    %696 = vmatpush1.msra.mxu0 %v501
    %697 = vmatprep.subr.mxu0 %v506
    %698 = vmatpush1.msra.mxu0 %v505
    %699 = vmatprep.subr.mxu0 %v510
    %700 = vmatpush1.msra.mxu0 %v509
    %701 = vmatprep.subr.mxu0 %v514
    %702 = vmatpush1.msra.mxu0 %v513
    %703 = vmatprep.subr.mxu0 %v518
    %704 = vmatpush1.msra.mxu0 %v517
    %705 = vmatprep.subr.mxu0 %v522
    %706 = vmatpush1.msra.mxu0 %v521
    %707 = vmatprep.subr.mxu0 %v526
    %708 = vmatpush1.msra.mxu0 %v525
    %709 = vmatprep.subr.mxu0 %v530
    %710 = vmatpush1.msra.mxu0 %v529
    %711 = vmatprep.subr.mxu0 %v534
    %712 = vmatpush1.msra.mxu0 %v533
    %713 = vmatprep.subr.mxu0 %v538
    %714 = vmatpush1.msra.mxu0 %v537
    %715 = vmatprep.subr.mxu0 %v542
    %716 = vmatpush1.msra.mxu0 %v541
    %717 = vmatprep.subr.mxu0 %v546
    %718 = vmatpush1.msra.mxu0 %v545
    %719 = vmatprep.subr.mxu0 %v550
    %720 = vmatpush1.msra.mxu0 %v549
    %721 = vmatprep.subr.mxu0 %v554
    %722 = vmatpush1.msra.mxu0 %v553
    %723 = vmatprep.subr.mxu0 %v558
    %724 = vmatpush1.msra.mxu0 %v557
    %725 = vmatprep.subr.mxu0 %v562
    %726 = vmatpush1.msra.mxu0 %v561
    %727 = vmatprep.subr.mxu0 %v566
    %728 = vmatpush1.msra.mxu0 %v565
    %729 = vmatprep.subr.mxu0 %v570
    %730 = vmatpush1.msra.mxu0 %v569
    %731 = vmatprep.subr.mxu0 %v574
    %732 = vmatpush1.msra.mxu0 %v573
    %733 = vmatprep.subr.mxu0 %v578
    %734 = vmatpush1.msra.mxu0 %v577
    %735 = vmatprep.subr.mxu0 %v582
    %736 = vmatpush1.msra.mxu0 %v581
    %737 = vmatprep.subr.mxu0 %v586
    %738 = vmatpush1.msra.mxu0 %v585
    %739 = vmatprep.subr.mxu0 %v590
    %740 = vmatpush1.msra.mxu0 %v589
    %741 = vmatprep.subr.mxu0 %v594
    %742 = vmatpush1.msra.mxu0 %v593
    %743 = vmatprep.subr.mxu0 %v598
    %744 = vmatpush1.msra.mxu0 %v597
    %745 = vmatprep.subr.mxu0 %v602
    %746 = vmatpush1.msra.mxu0 %v601
    %747 = vmatprep.subr.mxu0 %v606
    %748 = vmatpush1.msra.mxu0 %v605
    %749 = vmatprep.mubr.f32.mxu0 %v350
    %750 = vmatmul.mubr.f32.gmra.mrb[0].mxu0 %v275
    %v751 = vpop.f32.mrb[0].mxu0
    %v752 = vadd.f32 %v681, %v751
    %v753 = vpop.f32.mrb[0].mxu0
    %v754 = vadd.f32 %v683, %v753
    %755 = vdwg.mxu0
    %756 = vmatprep.subr.mxu0 %v356
    %757 = vmatpush1.msra.mxu0 %v355
    %758 = vmatprep.subr.mxu0 %v360
    %759 = vmatpush1.msra.mxu0 %v359
    %760 = vmatprep.subr.mxu0 %v364
    %761 = vmatpush1.msra.mxu0 %v363
    %762 = vmatprep.subr.mxu0 %v368
    %763 = vmatpush1.msra.mxu0 %v367
    %764 = vmatprep.subr.mxu0 %v372
    %765 = vmatpush1.msra.mxu0 %v371
    %766 = vmatprep.subr.mxu0 %v376
    %767 = vmatpush1.msra.mxu0 %v375
    %768 = vmatprep.subr.mxu0 %v380
    %769 = vmatpush1.msra.mxu0 %v379
    %770 = vmatprep.subr.mxu0 %v384
    %771 = vmatpush1.msra.mxu0 %v383
    %772 = vmatprep.subr.mxu0 %v388
    %773 = vmatpush1.msra.mxu0 %v387
    %774 = vmatprep.subr.mxu0 %v392
    %775 = vmatpush1.msra.mxu0 %v391
    %776 = vmatprep.subr.mxu0 %v396
    %777 = vmatpush1.msra.mxu0 %v395
    %778 = vmatprep.subr.mxu0 %v400
    %779 = vmatpush1.msra.mxu0 %v399
    %780 = vmatprep.subr.mxu0 %v404
    %781 = vmatpush1.msra.mxu0 %v403
    %782 = vmatprep.subr.mxu0 %v408
    %783 = vmatpush1.msra.mxu0 %v407
    %784 = vmatprep.subr.mxu0 %v412
    %785 = vmatpush1.msra.mxu0 %v411
    %786 = vmatprep.subr.mxu0 %v416
    %787 = vmatpush1.msra.mxu0 %v415
    %788 = vmatprep.subr.mxu0 %v420
    %789 = vmatpush1.msra.mxu0 %v419
    %790 = vmatprep.subr.mxu0 %v424
    %791 = vmatpush1.msra.mxu0 %v423
    %792 = vmatprep.subr.mxu0 %v428
    %793 = vmatpush1.msra.mxu0 %v427
    %794 = vmatprep.subr.mxu0 %v432
    %795 = vmatpush1.msra.mxu0 %v431
    %796 = vmatprep.subr.mxu0 %v436
    %797 = vmatpush1.msra.mxu0 %v435
    %798 = vmatprep.subr.mxu0 %v440
    %799 = vmatpush1.msra.mxu0 %v439
    %800 = vmatprep.subr.mxu0 %v444
    %801 = vmatpush1.msra.mxu0 %v443
    %802 = vmatprep.subr.mxu0 %v448
    %803 = vmatpush1.msra.mxu0 %v447
    %804 = vmatprep.subr.mxu0 %v452
    %805 = vmatpush1.msra.mxu0 %v451
    %806 = vmatprep.subr.mxu0 %v456
    %807 = vmatpush1.msra.mxu0 %v455
    %808 = vmatprep.subr.mxu0 %v460
    %809 = vmatpush1.msra.mxu0 %v459
    %810 = vmatprep.subr.mxu0 %v464
    %811 = vmatpush1.msra.mxu0 %v463
    %812 = vmatprep.subr.mxu0 %v468
    %813 = vmatpush1.msra.mxu0 %v467
    %814 = vmatprep.subr.mxu0 %v472
    %815 = vmatpush1.msra.mxu0 %v471
    %816 = vmatprep.subr.mxu0 %v476
    %817 = vmatpush1.msra.mxu0 %v475
    %818 = vmatprep.subr.mxu0 %v480
    %819 = vmatpush1.msra.mxu0 %v479
    %820 = vmatprep.mubr.f32.mxu0 %v200
    %821 = vmatmul.mubr.f32.gmra.mrb[0].mxu0 %v125
    %v822 = vpop.f32.mrb[0].mxu0
    %v823 = vadd.f32 %v612, %v822
    %v824 = vpop.f32.mrb[0].mxu0
    %v825 = vadd.f32 %v612, %v824
    %826 = vdwg.mxu0
    %827 = vmatprep.subr.mxu0 %v484
    %828 = vmatpush1.msra.mxu0 %v483
    %829 = vmatprep.subr.mxu0 %v488
    %830 = vmatpush1.msra.mxu0 %v487
    %831 = vmatprep.subr.mxu0 %v492
    %832 = vmatpush1.msra.mxu0 %v491
    %833 = vmatprep.subr.mxu0 %v496
    %834 = vmatpush1.msra.mxu0 %v495
    %835 = vmatprep.subr.mxu0 %v500
    %836 = vmatpush1.msra.mxu0 %v499
    %837 = vmatprep.subr.mxu0 %v504
    %838 = vmatpush1.msra.mxu0 %v503
    %839 = vmatprep.subr.mxu0 %v508
    %840 = vmatpush1.msra.mxu0 %v507
    %841 = vmatprep.subr.mxu0 %v512
    %842 = vmatpush1.msra.mxu0 %v511
    %843 = vmatprep.subr.mxu0 %v516
    %844 = vmatpush1.msra.mxu0 %v515
    %845 = vmatprep.subr.mxu0 %v520
    %846 = vmatpush1.msra.mxu0 %v519
    %847 = vmatprep.subr.mxu0 %v524
    %848 = vmatpush1.msra.mxu0 %v523
    %849 = vmatprep.subr.mxu0 %v528
    %850 = vmatpush1.msra.mxu0 %v527
    %851 = vmatprep.subr.mxu0 %v532
    %852 = vmatpush1.msra.mxu0 %v531
    %853 = vmatprep.subr.mxu0 %v536
    %854 = vmatpush1.msra.mxu0 %v535
    %855 = vmatprep.subr.mxu0 %v540
    %856 = vmatpush1.msra.mxu0 %v539
    %857 = vmatprep.subr.mxu0 %v544
    %858 = vmatpush1.msra.mxu0 %v543
    %859 = vmatprep.subr.mxu0 %v548
    %860 = vmatpush1.msra.mxu0 %v547
    %861 = vmatprep.subr.mxu0 %v552
    %862 = vmatpush1.msra.mxu0 %v551
    %863 = vmatprep.subr.mxu0 %v556
    %864 = vmatpush1.msra.mxu0 %v555
    %865 = vmatprep.subr.mxu0 %v560
    %866 = vmatpush1.msra.mxu0 %v559
    %867 = vmatprep.subr.mxu0 %v564
    %868 = vmatpush1.msra.mxu0 %v563
    %869 = vmatprep.subr.mxu0 %v568
    %870 = vmatpush1.msra.mxu0 %v567
    %871 = vmatprep.subr.mxu0 %v572
    %872 = vmatpush1.msra.mxu0 %v571
    %873 = vmatprep.subr.mxu0 %v576
    %874 = vmatpush1.msra.mxu0 %v575
    %875 = vmatprep.subr.mxu0 %v580
    %876 = vmatpush1.msra.mxu0 %v579
    %877 = vmatprep.subr.mxu0 %v584
    %878 = vmatpush1.msra.mxu0 %v583
    %879 = vmatprep.subr.mxu0 %v588
    %880 = vmatpush1.msra.mxu0 %v587
    %881 = vmatprep.subr.mxu0 %v592
    %882 = vmatpush1.msra.mxu0 %v591
    %883 = vmatprep.subr.mxu0 %v596
    %884 = vmatpush1.msra.mxu0 %v595
    %885 = vmatprep.subr.mxu0 %v600
    %886 = vmatpush1.msra.mxu0 %v599
    %887 = vmatprep.subr.mxu0 %v604
    %888 = vmatpush1.msra.mxu0 %v603
    %889 = vmatprep.subr.mxu0 %v608
    %890 = vmatpush1.msra.mxu0 %v607
    %891 = vmatprep.mubr.f32.mxu0 %v350
    %892 = vmatmul.mubr.f32.gmra.mrb[0].mxu0 %v275
    %v893 = vpop.f32.mrb[0].mxu0
    %v894 = vadd.f32 %v823, %v893
    %v895 = vpop.f32.mrb[0].mxu0
    %v896 = vadd.f32 %v825, %v895
    %897 = vdwg.mxu0
    %v898 = vld [vmem:[%s1] sm:$0xff]
    %v899 = vld [vmem:[%s1 + $0x8] sm:$0xff]
    %v900 = vld [vmem:[%s1 + $0x10] sm:$0xff]
    %v901 = vld [vmem:[%s1 + $0x18] sm:$0xff]
    %v902 = vadd.f32 %v752, %v898
    %v903 = vadd.f32 %v754, %v899
    %v904 = vadd.f32 %v894, %v900
    %v905 = vadd.f32 %v896, %v901
    %v906 = vld [vmem:[%s4] sm:$0xff]
    %907 = vrot.lane.b32.xlu0 %v902, 17
    %v908 = vpop.permute.xlu0 %907
    %909 = vrot.lane.b32.xlu0 %v903, 17
    %v910 = vpop.permute.xlu0 %909
    %911 = vrot.lane.b32.xlu0 %v904, 17
    %v912 = vpop.permute.xlu0 %911
    %913 = vrot.lane.b32.xlu0 %v905, 17
    %v914 = vpop.permute.xlu0 %913
    %v915 = vlaneseq
    %v916 = vand.u32 %v915, 127
    %vm917 = vcmp.lt.s32.totalorder %v916, 17
    %v918 = vsel %vm917, %v912, %v914
    %v919 = vsel %vm917, %v910, %v912
    %v920 = vsel %vm917, %v908, %v910
    %v921 = vsel %vm917, %v914, %v908
    %v922 = vlaneseq
    %v923 = vshrl.u32 %v922, 7
    %v924 = vsub.s32 0, %v923
    %v925 = vrot.slane %v43, %v924
    %v926 = vlaneseq
    %v927 = vshrl.u32 %v926, 7
    %v928 = vsub.s32 0, %v927
    %v929 = vrot.slane %v44, %v928
    %v930 = vlaneseq
    %v931 = vshrl.u32 %v930, 7
    %v932 = vsub.s32 0, %v931
    %v933 = vrot.slane %v45, %v932
    %v934 = vlaneseq
    %v935 = vshrl.u32 %v934, 7
    %v936 = vsub.s32 0, %v935
    %v937 = vrot.slane %v46, %v936
    %v938 = vmul.f32 %v921, %v925
    %v939 = vmul.f32 %v920, %v929
    %v940 = vmul.f32 %v919, %v933
    %v941 = vmul.f32 %v918, %v937
    %942 = vrot.lane.b32.xlu0 %v902, 16
    %v943 = vpop.permute.xlu0 %942
    %944 = vrot.lane.b32.xlu0 %v903, 16
    %v945 = vpop.permute.xlu0 %944
    %946 = vrot.lane.b32.xlu0 %v904, 16
    %v947 = vpop.permute.xlu0 %946
    %948 = vrot.lane.b32.xlu0 %v905, 16
    %v949 = vpop.permute.xlu0 %948
    %vm950 = vcmp.lt.s32.totalorder %v916, 16
    %v951 = vsel %vm950, %v947, %v949
    %v952 = vsel %vm950, %v945, %v947
    %v953 = vsel %vm950, %v943, %v945
    %v954 = vsel %vm950, %v949, %v943
    %v955 = vlaneseq
    %v956 = vshrl.u32 %v955, 7
    %v957 = vsub.s32 1, %v956
    %v958 = vrot.slane %v43, %v957
    %v959 = vlaneseq
    %v960 = vshrl.u32 %v959, 7
    %v961 = vsub.s32 1, %v960
    %v962 = vrot.slane %v44, %v961
    %v963 = vlaneseq
    %v964 = vshrl.u32 %v963, 7
    %v965 = vsub.s32 1, %v964
    %v966 = vrot.slane %v45, %v965
    %v967 = vlaneseq
    %v968 = vshrl.u32 %v967, 7
    %v969 = vsub.s32 1, %v968
    %v970 = vrot.slane %v46, %v969
    %v971 = vmul.f32 %v954, %v958
    %v972 = vmul.f32 %v953, %v962
    %v973 = vmul.f32 %v952, %v966
    %v974 = vmul.f32 %v951, %v970
    %975 = vrot.lane.b32.xlu0 %v902, 15
    %v976 = vpop.permute.xlu0 %975
    %977 = vrot.lane.b32.xlu0 %v903, 15
    %v978 = vpop.permute.xlu0 %977
    %979 = vrot.lane.b32.xlu0 %v904, 15
    %v980 = vpop.permute.xlu0 %979
    %981 = vrot.lane.b32.xlu0 %v905, 15
    %v982 = vpop.permute.xlu0 %981
    %vm983 = vcmp.lt.s32.totalorder %v916, 15
    %v984 = vsel %vm983, %v980, %v982
    %v985 = vsel %vm983, %v978, %v980
    %v986 = vsel %vm983, %v976, %v978
    %v987 = vsel %vm983, %v982, %v976
    %v988 = vlaneseq
    %v989 = vshrl.u32 %v988, 7
    %v990 = vsub.s32 2, %v989
    %v991 = vrot.slane %v43, %v990
    %v992 = vlaneseq
    %v993 = vshrl.u32 %v992, 7
    %v994 = vsub.s32 2, %v993
    %v995 = vrot.slane %v44, %v994
    %v996 = vlaneseq
    %v997 = vshrl.u32 %v996, 7
    %v998 = vsub.s32 2, %v997
    %v999 = vrot.slane %v45, %v998
    %v1000 = vlaneseq
    %v1001 = vshrl.u32 %v1000, 7
    %v1002 = vsub.s32 2, %v1001
    %v1003 = vrot.slane %v46, %v1002
    %v1004 = vmul.f32 %v987, %v991
    %v1005 = vmul.f32 %v986, %v995
    %v1006 = vmul.f32 %v985, %v999
    %v1007 = vmul.f32 %v984, %v1003
    %1008 = vrot.lane.b32.xlu0 %v902, 1
    %v1009 = vpop.permute.xlu0 %1008
    %1010 = vrot.lane.b32.xlu0 %v903, 1
    %v1011 = vpop.permute.xlu0 %1010
    %1012 = vrot.lane.b32.xlu0 %v904, 1
    %v1013 = vpop.permute.xlu0 %1012
    %1014 = vrot.lane.b32.xlu0 %v905, 1
    %v1015 = vpop.permute.xlu0 %1014
    %vm1016 = vcmp.lt.s32.totalorder %v916, 1
    %v1017 = vsel %vm1016, %v1013, %v1015
    %v1018 = vsel %vm1016, %v1011, %v1013
    %v1019 = vsel %vm1016, %v1009, %v1011
    %v1020 = vsel %vm1016, %v1015, %v1009
    %v1021 = vlaneseq
    %v1022 = vshrl.u32 %v1021, 7
    %v1023 = vsub.s32 3, %v1022
    %v1024 = vrot.slane %v43, %v1023
    %v1025 = vlaneseq
    %v1026 = vshrl.u32 %v1025, 7
    %v1027 = vsub.s32 3, %v1026
    %v1028 = vrot.slane %v44, %v1027
    %v1029 = vlaneseq
    %v1030 = vshrl.u32 %v1029, 7
    %v1031 = vsub.s32 3, %v1030
    %v1032 = vrot.slane %v45, %v1031
    %v1033 = vlaneseq
    %v1034 = vshrl.u32 %v1033, 7
    %v1035 = vsub.s32 3, %v1034
    %v1036 = vrot.slane %v46, %v1035
    %v1037 = vmul.f32 %v1020, %v1024
    %v1038 = vmul.f32 %v1019, %v1028
    %v1039 = vmul.f32 %v1018, %v1032
    %v1040 = vmul.f32 %v1017, %v1036
    %1041 = vrot.lane.b32.xlu0 %v902, 127
    %v1042 = vpop.permute.xlu0 %1041
    %1043 = vrot.lane.b32.xlu0 %v903, 127
    %v1044 = vpop.permute.xlu0 %1043
    %1045 = vrot.lane.b32.xlu0 %v904, 127
    %v1046 = vpop.permute.xlu0 %1045
    %1047 = vrot.lane.b32.xlu0 %v905, 127
    %v1048 = vpop.permute.xlu0 %1047
    %vm1049 = vcmp.lt.s32.totalorder %v916, 127
    %v1050 = vsel %vm1049, %v1046, %v1048
    %v1051 = vsel %vm1049, %v1044, %v1046
    %v1052 = vsel %vm1049, %v1042, %v1044
    %v1053 = vsel %vm1049, %v1048, %v1042
    %v1054 = vlaneseq
    %v1055 = vshrl.u32 %v1054, 7
    %v1056 = vsub.s32 5, %v1055
    %v1057 = vrot.slane %v43, %v1056
    %v1058 = vlaneseq
    %v1059 = vshrl.u32 %v1058, 7
    %v1060 = vsub.s32 5, %v1059
    %v1061 = vrot.slane %v44, %v1060
    %v1062 = vlaneseq
    %v1063 = vshrl.u32 %v1062, 7
    %v1064 = vsub.s32 5, %v1063
    %v1065 = vrot.slane %v45, %v1064
    %v1066 = vlaneseq
    %v1067 = vshrl.u32 %v1066, 7
    %v1068 = vsub.s32 5, %v1067
    %v1069 = vrot.slane %v46, %v1068
    %v1070 = vmul.f32 %v1052, %v1057
    %v1071 = vmul.f32 %v1051, %v1061
    %v1072 = vmul.f32 %v1050, %v1065
    %v1073 = vmul.f32 %v1053, %v1069
    %1074 = vrot.lane.b32.xlu0 %v902, 113
    %v1075 = vpop.permute.xlu0 %1074
    %1076 = vrot.lane.b32.xlu0 %v903, 113
    %v1077 = vpop.permute.xlu0 %1076
    %1078 = vrot.lane.b32.xlu0 %v904, 113
    %v1079 = vpop.permute.xlu0 %1078
    %1080 = vrot.lane.b32.xlu0 %v905, 113
    %v1081 = vpop.permute.xlu0 %1080
    %vm1082 = vcmp.lt.s32.totalorder %v916, 113
    %v1083 = vsel %vm1082, %v1079, %v1081
    %v1084 = vsel %vm1082, %v1077, %v1079
    %v1085 = vsel %vm1082, %v1075, %v1077
    %v1086 = vsel %vm1082, %v1081, %v1075
    %v1087 = vlaneseq
    %v1088 = vshrl.u32 %v1087, 7
    %v1089 = vsub.s32 6, %v1088
    %v1090 = vrot.slane %v43, %v1089
    %v1091 = vlaneseq
    %v1092 = vshrl.u32 %v1091, 7
    %v1093 = vsub.s32 6, %v1092
    %v1094 = vrot.slane %v44, %v1093
    %v1095 = vlaneseq
    %v1096 = vshrl.u32 %v1095, 7
    %v1097 = vsub.s32 6, %v1096
    %v1098 = vrot.slane %v45, %v1097
    %v1099 = vlaneseq
    %v1100 = vshrl.u32 %v1099, 7
    %v1101 = vsub.s32 6, %v1100
    %v1102 = vrot.slane %v46, %v1101
    %v1103 = vmul.f32 %v1085, %v1090
    %v1104 = vmul.f32 %v1084, %v1094
    %v1105 = vmul.f32 %v1083, %v1098
    %v1106 = vmul.f32 %v1086, %v1102
    %1107 = vrot.lane.b32.xlu0 %v902, 112
    %v1108 = vpop.permute.xlu0 %1107
    %1109 = vrot.lane.b32.xlu0 %v903, 112
    %v1110 = vpop.permute.xlu0 %1109
    %1111 = vrot.lane.b32.xlu0 %v904, 112
    %v1112 = vpop.permute.xlu0 %1111
    %1113 = vrot.lane.b32.xlu0 %v905, 112
    %v1114 = vpop.permute.xlu0 %1113
    %vm1115 = vcmp.lt.s32.totalorder %v916, 112
    %v1116 = vsel %vm1115, %v1112, %v1114
    %v1117 = vsel %vm1115, %v1110, %v1112
    %v1118 = vsel %vm1115, %v1108, %v1110
    %v1119 = vsel %vm1115, %v1114, %v1108
    %v1120 = vlaneseq
    %v1121 = vshrl.u32 %v1120, 7
    %v1122 = vsub.s32 7, %v1121
    %v1123 = vrot.slane %v43, %v1122
    %v1124 = vlaneseq
    %v1125 = vshrl.u32 %v1124, 7
    %v1126 = vsub.s32 7, %v1125
    %v1127 = vrot.slane %v44, %v1126
    %v1128 = vlaneseq
    %v1129 = vshrl.u32 %v1128, 7
    %v1130 = vsub.s32 7, %v1129
    %v1131 = vrot.slane %v45, %v1130
    %v1132 = vlaneseq
    %v1133 = vshrl.u32 %v1132, 7
    %v1134 = vsub.s32 7, %v1133
    %v1135 = vrot.slane %v46, %v1134
    %v1136 = vmul.f32 %v1118, %v1123
    %v1137 = vmul.f32 %v1117, %v1127
    %v1138 = vmul.f32 %v1116, %v1131
    %v1139 = vmul.f32 %v1119, %v1135
    %1140 = vrot.lane.b32.xlu0 %v902, 111
    %v1141 = vpop.permute.xlu0 %1140
    %1142 = vrot.lane.b32.xlu0 %v903, 111
    %v1143 = vpop.permute.xlu0 %1142
    %1144 = vrot.lane.b32.xlu0 %v904, 111
    %v1145 = vpop.permute.xlu0 %1144
    %1146 = vrot.lane.b32.xlu0 %v905, 111
    %v1147 = vpop.permute.xlu0 %1146
    %vm1148 = vcmp.lt.s32.totalorder %v916, 111
    %v1149 = vsel %vm1148, %v1145, %v1147
    %v1150 = vsel %vm1148, %v1143, %v1145
    %v1151 = vsel %vm1148, %v1141, %v1143
    %v1152 = vsel %vm1148, %v1147, %v1141
    %v1153 = vlaneseq
    %v1154 = vshrl.u32 %v1153, 7
    %v1155 = vsub.s32 0, %v1154
    %v1156 = vrot.slane %v47, %v1155
    %v1157 = vlaneseq
    %v1158 = vshrl.u32 %v1157, 7
    %v1159 = vsub.s32 0, %v1158
    %v1160 = vrot.slane %v48, %v1159
    %v1161 = vlaneseq
    %v1162 = vshrl.u32 %v1161, 7
    %v1163 = vsub.s32 0, %v1162
    %v1164 = vrot.slane %v49, %v1163
    %v1165 = vlaneseq
    %v1166 = vshrl.u32 %v1165, 7
    %v1167 = vsub.s32 0, %v1166
    %v1168 = vrot.slane %v50, %v1167
    %v1169 = vmul.f32 %v1151, %v1156
    %v1170 = vmul.f32 %v1150, %v1160
    %v1171 = vmul.f32 %v1149, %v1164
    %v1172 = vmul.f32 %v1152, %v1168
    %vm1173 = vcmask 588800
    %v1175 = vsel %vm1173, %v906, 0
    %1177 = vmatprep.subr.mxu0 %v939
    %1178 = vmatpush1.msra.mxu0 %v938
    %1179 = vmatprep.subr.mxu0 %v972
    %1180 = vmatpush1.msra.mxu0 %v971
    %1181 = vmatprep.subr.mxu0 %v1005
    %1182 = vmatpush1.msra.mxu0 %v1004
    %1183 = vmatprep.subr.mxu0 %v1038
    %1184 = vmatpush1.msra.mxu0 %v1037
    %1185 = vmatprep.subr.mxu0 %v903
    %1186 = vmatpush1.msra.mxu0 %v902
    %1187 = vmatprep.subr.mxu0 %v1071
    %1188 = vmatpush1.msra.mxu0 %v1070
    %1189 = vmatprep.subr.mxu0 %v1104
    %1190 = vmatpush1.msra.mxu0 %v1103
    %1191 = vmatprep.subr.mxu0 %v1137
    %1192 = vmatpush1.msra.mxu0 %v1136
    %1193 = vmatprep.subr.mxu0 %v1170
    %1194 = vmatpush1.msra.mxu0 %v1169
    %1195 = vmatprep.subr.mxu0 0.0
    %1196 = vmatpush1.msra.mxu0 0.0
    %1197 = vmatprep.subr.mxu0 0.0
    %1198 = vmatpush1.msra.mxu0 0.0
    %1199 = vmatprep.subr.mxu0 0.0
    %1200 = vmatpush1.msra.mxu0 0.0
    %1201 = vmatprep.subr.mxu0 0.0
    %1202 = vmatpush1.msra.mxu0 0.0
    %1203 = vmatprep.subr.mxu0 0.0
    %1204 = vmatpush1.msra.mxu0 0.0
    %1205 = vmatprep.subr.mxu0 0.0
    %1206 = vmatpush1.msra.mxu0 0.0
    %1207 = vmatprep.subr.mxu0 0.0
    %1208 = vmatpush1.msra.mxu0 0.0
    %1209 = vmatprep.subr.mxu0 0.0
    %1210 = vmatpush1.msra.mxu0 0.0
    %1211 = vmatprep.subr.mxu0 0.0
    %1212 = vmatpush1.msra.mxu0 0.0
    %1213 = vmatprep.subr.mxu0 0.0
    %1214 = vmatpush1.msra.mxu0 0.0
    %1215 = vmatprep.subr.mxu0 0.0
    %1216 = vmatpush1.msra.mxu0 0.0
    %1217 = vmatprep.subr.mxu0 0.0
    %1218 = vmatpush1.msra.mxu0 0.0
    %1219 = vmatprep.subr.mxu0 0.0
    %1220 = vmatpush1.msra.mxu0 0.0
    %1221 = vmatprep.subr.mxu0 0.0
    %1222 = vmatpush1.msra.mxu0 0.0
    %1223 = vmatprep.subr.mxu0 0.0
    %1224 = vmatpush1.msra.mxu0 0.0
    %1225 = vmatprep.subr.mxu0 0.0
    %1226 = vmatpush1.msra.mxu0 0.0
    %1227 = vmatprep.subr.mxu0 0.0
    %1228 = vmatpush1.msra.mxu0 0.0
    %1229 = vmatprep.subr.mxu0 0.0
    %1230 = vmatpush1.msra.mxu0 0.0
    %1231 = vmatprep.subr.mxu0 0.0
    %1232 = vmatpush1.msra.mxu0 0.0
    %1233 = vmatprep.subr.mxu0 0.0
    %1234 = vmatpush1.msra.mxu0 0.0
    %1235 = vmatprep.subr.mxu0 0.0
    %1236 = vmatpush1.msra.mxu0 0.0
    %1237 = vmatprep.subr.mxu0 0.0
    %1238 = vmatpush1.msra.mxu0 0.0
    %1239 = vmatprep.subr.mxu0 0.0
    %1240 = vmatpush1.msra.mxu0 0.0
    %1241 = vmatprep.mubr.f32.mxu0 0.0
    %1242 = vmatmul.mubr.f32.gmra.mrb[0].mxu0 %v1175
    %v1243 = vpop.f32.mrb[0].mxu0
    %v1244 = vadd.f32 0.0, %v1243
    %v1245 = vpop.f32.mrb[0].mxu0
    %v1246 = vadd.f32 0.0, %v1245
    %1247 = vdwg.mxu0
    %1248 = vmatprep.subr.mxu0 %v941
    %1249 = vmatpush1.msra.mxu0 %v940
    %1250 = vmatprep.subr.mxu0 %v974
    %1251 = vmatpush1.msra.mxu0 %v973
    %1252 = vmatprep.subr.mxu0 %v1007
    %1253 = vmatpush1.msra.mxu0 %v1006
    %1254 = vmatprep.subr.mxu0 %v1040
    %1255 = vmatpush1.msra.mxu0 %v1039
    %1256 = vmatprep.subr.mxu0 %v905
    %1257 = vmatpush1.msra.mxu0 %v904
    %1258 = vmatprep.subr.mxu0 %v1073
    %1259 = vmatpush1.msra.mxu0 %v1072
    %1260 = vmatprep.subr.mxu0 %v1106
    %1261 = vmatpush1.msra.mxu0 %v1105
    %1262 = vmatprep.subr.mxu0 %v1139
    %1263 = vmatpush1.msra.mxu0 %v1138
    %1264 = vmatprep.subr.mxu0 %v1172
    %1265 = vmatpush1.msra.mxu0 %v1171
    %1266 = vmatprep.subr.mxu0 0.0
    %1267 = vmatpush1.msra.mxu0 0.0
    %1268 = vmatprep.subr.mxu0 0.0
    %1269 = vmatpush1.msra.mxu0 0.0
    %1270 = vmatprep.subr.mxu0 0.0
    %1271 = vmatpush1.msra.mxu0 0.0
    %1272 = vmatprep.subr.mxu0 0.0
    %1273 = vmatpush1.msra.mxu0 0.0
    %1274 = vmatprep.subr.mxu0 0.0
    %1275 = vmatpush1.msra.mxu0 0.0
    %1276 = vmatprep.subr.mxu0 0.0
    %1277 = vmatpush1.msra.mxu0 0.0
    %1278 = vmatprep.subr.mxu0 0.0
    %1279 = vmatpush1.msra.mxu0 0.0
    %1280 = vmatprep.subr.mxu0 0.0
    %1281 = vmatpush1.msra.mxu0 0.0
    %1282 = vmatprep.subr.mxu0 0.0
    %1283 = vmatpush1.msra.mxu0 0.0
    %1284 = vmatprep.subr.mxu0 0.0
    %1285 = vmatpush1.msra.mxu0 0.0
    %1286 = vmatprep.subr.mxu0 0.0
    %1287 = vmatpush1.msra.mxu0 0.0
    %1288 = vmatprep.subr.mxu0 0.0
    %1289 = vmatpush1.msra.mxu0 0.0
    %1290 = vmatprep.subr.mxu0 0.0
    %1291 = vmatpush1.msra.mxu0 0.0
    %1292 = vmatprep.subr.mxu0 0.0
    %1293 = vmatpush1.msra.mxu0 0.0
    %1294 = vmatprep.subr.mxu0 0.0
    %1295 = vmatpush1.msra.mxu0 0.0
    %1296 = vmatprep.subr.mxu0 0.0
    %1297 = vmatpush1.msra.mxu0 0.0
    %1298 = vmatprep.subr.mxu0 0.0
    %1299 = vmatpush1.msra.mxu0 0.0
    %1300 = vmatprep.subr.mxu0 0.0
    %1301 = vmatpush1.msra.mxu0 0.0
    %1302 = vmatprep.subr.mxu0 0.0
    %1303 = vmatpush1.msra.mxu0 0.0
    %1304 = vmatprep.subr.mxu0 0.0
    %1305 = vmatpush1.msra.mxu0 0.0
    %1306 = vmatprep.subr.mxu0 0.0
    %1307 = vmatpush1.msra.mxu0 0.0
    %1308 = vmatprep.subr.mxu0 0.0
    %1309 = vmatpush1.msra.mxu0 0.0
    %1310 = vmatprep.subr.mxu0 0.0
    %1311 = vmatpush1.msra.mxu0 0.0
    %1312 = vmatprep.mubr.f32.mxu0 0.0
    %1313 = vmatmul.mubr.f32.gmra.mrb[0].mxu0 %v1175
    %v1314 = vpop.f32.mrb[0].mxu0
    %v1315 = vadd.f32 0.0, %v1314
    %v1316 = vpop.f32.mrb[0].mxu0
    %v1317 = vadd.f32 0.0, %v1316
    %1318 = vdwg.mxu0
    %v1319 = vadd.f32 %v1244, %v1246
    %v1320 = vadd.f32 %v1319, %v1315
    %v1321 = vadd.f32 %v1320, %v1317
    %1322 = vadd.xlane.f32.xlu0 %v1321
    %v1323 = vpop.xlane.xlu0 %1322
    %v1324 = vmul.f32 %v1323, 0.001953125
    %v1325 = vsub.f32 %v1244, %v1324
    %v1326 = vsub.f32 %v1246, %v1324
    %v1327 = vsub.f32 %v1315, %v1324
    %v1328 = vsub.f32 %v1317, %v1324
    %v1329 = vmul.f32 %v1325, %v1325
    %v1330 = vmul.f32 %v1326, %v1326
    %v1331 = vmul.f32 %v1327, %v1327
    %v1332 = vmul.f32 %v1328, %v1328
    %v1333 = vadd.f32 %v1329, %v1330
    %v1334 = vadd.f32 %v1333, %v1331
    %v1335 = vadd.f32 %v1334, %v1332
    %1336 = vadd.xlane.f32.xlu0 %v1335
    %v1337 = vpop.xlane.xlu0 %1336
    %v1338 = vmul.f32 %v1337, 0.001953125
    %v1339 = vadd.f32 %v1338, 1e-05
    %v1340 = vrsqrt.pop %v1339
    %v1341 = vmul.f32 %v51, %v1340
    %1343 = vset.pattern.permute.xlu0 1
    %1344 = vperm.xlu0 %1343, %v1341
    %v1345 = vpop.permute.xlu0 %1344
    %v1347 = vmul.f32 %v1325, %v1345
    %v1348 = vmul.f32 %v1326, %v1345
    %v1349 = vmul.f32 %v1327, %v1345
    %v1350 = vmul.f32 %v1328, %v1345
    %1351 = vset.pattern.permute.xlu0 2
    %1352 = vperm.xlu0 %1351, %v51
    %v1353 = vpop.permute.xlu0 %1352
    %v1355 = vadd.f32 %v1347, %v1353
    %v1356 = vadd.f32 %v1348, %v1353
    %v1357 = vadd.f32 %v1349, %v1353
    %v1358 = vadd.f32 %v1350, %v1353
    %v1359 = vmax.f32 %v1355, 0.0
    %v1360 = vmax.f32 %v1356, 0.0
    %v1361 = vmax.f32 %v1357, 0.0
    %v1362 = vmax.f32 %v1358, 0.0
    %v1363 = vld [vmem:[%s5] sm:$0xf]
    %1364 = vrot.lane.b32.xlu0 %v1359, 17
    %v1365 = vpop.permute.xlu0 %1364
    %1366 = vrot.lane.b32.xlu0 %v1360, 17
    %v1367 = vpop.permute.xlu0 %1366
    %1368 = vrot.lane.b32.xlu0 %v1361, 17
    %v1369 = vpop.permute.xlu0 %1368
    %1370 = vrot.lane.b32.xlu0 %v1362, 17
    %v1371 = vpop.permute.xlu0 %1370
    %v1372 = vsel %vm917, %v1369, %v1371
    %v1373 = vsel %vm917, %v1367, %v1369
    %v1374 = vsel %vm917, %v1365, %v1367
    %v1375 = vsel %vm917, %v1371, %v1365
    %v1376 = vmul.f32 %v1375, %v925
    %v1377 = vmul.f32 %v1374, %v929
    %v1378 = vmul.f32 %v1373, %v933
    %v1379 = vmul.f32 %v1372, %v937
    %1380 = vrot.lane.b32.xlu0 %v1359, 16
    %v1381 = vpop.permute.xlu0 %1380
    %1382 = vrot.lane.b32.xlu0 %v1360, 16
    %v1383 = vpop.permute.xlu0 %1382
    %1384 = vrot.lane.b32.xlu0 %v1361, 16
    %v1385 = vpop.permute.xlu0 %1384
    %1386 = vrot.lane.b32.xlu0 %v1362, 16
    %v1387 = vpop.permute.xlu0 %1386
    %v1388 = vsel %vm950, %v1385, %v1387
    %v1389 = vsel %vm950, %v1383, %v1385
    %v1390 = vsel %vm950, %v1381, %v1383
    %v1391 = vsel %vm950, %v1387, %v1381
    %v1392 = vmul.f32 %v1391, %v958
    %v1393 = vmul.f32 %v1390, %v962
    %v1394 = vmul.f32 %v1389, %v966
    %v1395 = vmul.f32 %v1388, %v970
    %1396 = vrot.lane.b32.xlu0 %v1359, 15
    %v1397 = vpop.permute.xlu0 %1396
    %1398 = vrot.lane.b32.xlu0 %v1360, 15
    %v1399 = vpop.permute.xlu0 %1398
    %1400 = vrot.lane.b32.xlu0 %v1361, 15
    %v1401 = vpop.permute.xlu0 %1400
    %1402 = vrot.lane.b32.xlu0 %v1362, 15
    %v1403 = vpop.permute.xlu0 %1402
    %v1404 = vsel %vm983, %v1401, %v1403
    %v1405 = vsel %vm983, %v1399, %v1401
    %v1406 = vsel %vm983, %v1397, %v1399
    %v1407 = vsel %vm983, %v1403, %v1397
    %v1408 = vmul.f32 %v1407, %v991
    %v1409 = vmul.f32 %v1406, %v995
    %v1410 = vmul.f32 %v1405, %v999
    %v1411 = vmul.f32 %v1404, %v1003
    %1412 = vrot.lane.b32.xlu0 %v1359, 1
    %v1413 = vpop.permute.xlu0 %1412
    %1414 = vrot.lane.b32.xlu0 %v1360, 1
    %v1415 = vpop.permute.xlu0 %1414
    %1416 = vrot.lane.b32.xlu0 %v1361, 1
    %v1417 = vpop.permute.xlu0 %1416
    %1418 = vrot.lane.b32.xlu0 %v1362, 1
    %v1419 = vpop.permute.xlu0 %1418
    %v1420 = vsel %vm1016, %v1417, %v1419
    %v1421 = vsel %vm1016, %v1415, %v1417
    %v1422 = vsel %vm1016, %v1413, %v1415
    %v1423 = vsel %vm1016, %v1419, %v1413
    %v1424 = vmul.f32 %v1423, %v1024
    %v1425 = vmul.f32 %v1422, %v1028
    %v1426 = vmul.f32 %v1421, %v1032
    %v1427 = vmul.f32 %v1420, %v1036
    %1428 = vrot.lane.b32.xlu0 %v1359, 127
    %v1429 = vpop.permute.xlu0 %1428
    %1430 = vrot.lane.b32.xlu0 %v1360, 127
    %v1431 = vpop.permute.xlu0 %1430
    %1432 = vrot.lane.b32.xlu0 %v1361, 127
    %v1433 = vpop.permute.xlu0 %1432
    %1434 = vrot.lane.b32.xlu0 %v1362, 127
    %v1435 = vpop.permute.xlu0 %1434
    %v1436 = vsel %vm1049, %v1433, %v1435
    %v1437 = vsel %vm1049, %v1431, %v1433
    %v1438 = vsel %vm1049, %v1429, %v1431
    %v1439 = vsel %vm1049, %v1435, %v1429
    %v1440 = vmul.f32 %v1438, %v1057
    %v1441 = vmul.f32 %v1437, %v1061
    %v1442 = vmul.f32 %v1436, %v1065
    %v1443 = vmul.f32 %v1439, %v1069
    %1444 = vrot.lane.b32.xlu0 %v1359, 113
    %v1445 = vpop.permute.xlu0 %1444
    %1446 = vrot.lane.b32.xlu0 %v1360, 113
    %v1447 = vpop.permute.xlu0 %1446
    %1448 = vrot.lane.b32.xlu0 %v1361, 113
    %v1449 = vpop.permute.xlu0 %1448
    %1450 = vrot.lane.b32.xlu0 %v1362, 113
    %v1451 = vpop.permute.xlu0 %1450
    %v1452 = vsel %vm1082, %v1449, %v1451
    %v1453 = vsel %vm1082, %v1447, %v1449
    %v1454 = vsel %vm1082, %v1445, %v1447
    %v1455 = vsel %vm1082, %v1451, %v1445
    %v1456 = vmul.f32 %v1454, %v1090
    %v1457 = vmul.f32 %v1453, %v1094
    %v1458 = vmul.f32 %v1452, %v1098
    %v1459 = vmul.f32 %v1455, %v1102
    %1460 = vrot.lane.b32.xlu0 %v1359, 112
    %v1461 = vpop.permute.xlu0 %1460
    %1462 = vrot.lane.b32.xlu0 %v1360, 112
    %v1463 = vpop.permute.xlu0 %1462
    %1464 = vrot.lane.b32.xlu0 %v1361, 112
    %v1465 = vpop.permute.xlu0 %1464
    %1466 = vrot.lane.b32.xlu0 %v1362, 112
    %v1467 = vpop.permute.xlu0 %1466
    %v1468 = vsel %vm1115, %v1465, %v1467
    %v1469 = vsel %vm1115, %v1463, %v1465
    %v1470 = vsel %vm1115, %v1461, %v1463
    %v1471 = vsel %vm1115, %v1467, %v1461
    %v1472 = vmul.f32 %v1470, %v1123
    %v1473 = vmul.f32 %v1469, %v1127
    %v1474 = vmul.f32 %v1468, %v1131
    %v1475 = vmul.f32 %v1471, %v1135
    %1476 = vrot.lane.b32.xlu0 %v1359, 111
    %v1477 = vpop.permute.xlu0 %1476
    %1478 = vrot.lane.b32.xlu0 %v1360, 111
    %v1479 = vpop.permute.xlu0 %1478
    %1480 = vrot.lane.b32.xlu0 %v1361, 111
    %v1481 = vpop.permute.xlu0 %1480
    %1482 = vrot.lane.b32.xlu0 %v1362, 111
    %v1483 = vpop.permute.xlu0 %1482
    %v1484 = vsel %vm1148, %v1481, %v1483
    %v1485 = vsel %vm1148, %v1479, %v1481
    %v1486 = vsel %vm1148, %v1477, %v1479
    %v1487 = vsel %vm1148, %v1483, %v1477
    %v1488 = vmul.f32 %v1486, %v1156
    %v1489 = vmul.f32 %v1485, %v1160
    %v1490 = vmul.f32 %v1484, %v1164
    %v1491 = vmul.f32 %v1487, %v1168
    %v1493 = vsel %vm1173, %v1363, 0
    %1495 = vmatprep.subr.mxu0 %v1377
    %1496 = vmatpush1.msra.mxu0 %v1376
    %1497 = vmatprep.subr.mxu0 %v1393
    %1498 = vmatpush1.msra.mxu0 %v1392
    %1499 = vmatprep.subr.mxu0 %v1409
    %1500 = vmatpush1.msra.mxu0 %v1408
    %1501 = vmatprep.subr.mxu0 %v1425
    %1502 = vmatpush1.msra.mxu0 %v1424
    %1503 = vmatprep.subr.mxu0 %v1360
    %1504 = vmatpush1.msra.mxu0 %v1359
    %1505 = vmatprep.subr.mxu0 %v1441
    %1506 = vmatpush1.msra.mxu0 %v1440
    %1507 = vmatprep.subr.mxu0 %v1457
    %1508 = vmatpush1.msra.mxu0 %v1456
    %1509 = vmatprep.subr.mxu0 %v1473
    %1510 = vmatpush1.msra.mxu0 %v1472
    %1511 = vmatprep.subr.mxu0 %v1489
    %1512 = vmatpush1.msra.mxu0 %v1488
    %1513 = vmatprep.subr.mxu0 0.0
    %1514 = vmatpush1.msra.mxu0 0.0
    %1515 = vmatprep.subr.mxu0 0.0
    %1516 = vmatpush1.msra.mxu0 0.0
    %1517 = vmatprep.subr.mxu0 0.0
    %1518 = vmatpush1.msra.mxu0 0.0
    %1519 = vmatprep.subr.mxu0 0.0
    %1520 = vmatpush1.msra.mxu0 0.0
    %1521 = vmatprep.subr.mxu0 0.0
    %1522 = vmatpush1.msra.mxu0 0.0
    %1523 = vmatprep.subr.mxu0 0.0
    %1524 = vmatpush1.msra.mxu0 0.0
    %1525 = vmatprep.subr.mxu0 0.0
    %1526 = vmatpush1.msra.mxu0 0.0
    %1527 = vmatprep.subr.mxu0 0.0
    %1528 = vmatpush1.msra.mxu0 0.0
    %1529 = vmatprep.subr.mxu0 0.0
    %1530 = vmatpush1.msra.mxu0 0.0
    %1531 = vmatprep.subr.mxu0 0.0
    %1532 = vmatpush1.msra.mxu0 0.0
    %1533 = vmatprep.subr.mxu0 0.0
    %1534 = vmatpush1.msra.mxu0 0.0
    %1535 = vmatprep.subr.mxu0 0.0
    %1536 = vmatpush1.msra.mxu0 0.0
    %1537 = vmatprep.subr.mxu0 0.0
    %1538 = vmatpush1.msra.mxu0 0.0
    %1539 = vmatprep.subr.mxu0 0.0
    %1540 = vmatpush1.msra.mxu0 0.0
    %1541 = vmatprep.subr.mxu0 0.0
    %1542 = vmatpush1.msra.mxu0 0.0
    %1543 = vmatprep.subr.mxu0 0.0
    %1544 = vmatpush1.msra.mxu0 0.0
    %1545 = vmatprep.subr.mxu0 0.0
    %1546 = vmatpush1.msra.mxu0 0.0
    %1547 = vmatprep.subr.mxu0 0.0
    %1548 = vmatpush1.msra.mxu0 0.0
    %1549 = vmatprep.subr.mxu0 0.0
    %1550 = vmatpush1.msra.mxu0 0.0
    %1551 = vmatprep.subr.mxu0 0.0
    %1552 = vmatpush1.msra.mxu0 0.0
    %1553 = vmatprep.subr.mxu0 0.0
    %1554 = vmatpush1.msra.mxu0 0.0
    %1555 = vmatprep.subr.mxu0 0.0
    %1556 = vmatpush1.msra.mxu0 0.0
    %1557 = vmatprep.subr.mxu0 0.0
    %1558 = vmatpush1.msra.mxu0 0.0
    %1559 = vmatprep.mubr.f32.mxu0 0.0
    %1560 = vmatmul.mubr.f32.gmra.mrb[0].mxu0 %v1493
    %v1561 = vpop.f32.mrb[0].mxu0
    %v1562 = vadd.f32 0.0, %v1561
    %v1563 = vpop.f32.mrb[0].mxu0
    %v1564 = vadd.f32 0.0, %v1563
    %1565 = vdwg.mxu0
    %1566 = vmatprep.subr.mxu0 %v1379
    %1567 = vmatpush1.msra.mxu0 %v1378
    %1568 = vmatprep.subr.mxu0 %v1395
    %1569 = vmatpush1.msra.mxu0 %v1394
    %1570 = vmatprep.subr.mxu0 %v1411
    %1571 = vmatpush1.msra.mxu0 %v1410
    %1572 = vmatprep.subr.mxu0 %v1427
    %1573 = vmatpush1.msra.mxu0 %v1426
    %1574 = vmatprep.subr.mxu0 %v1362
    %1575 = vmatpush1.msra.mxu0 %v1361
    %1576 = vmatprep.subr.mxu0 %v1443
    %1577 = vmatpush1.msra.mxu0 %v1442
    %1578 = vmatprep.subr.mxu0 %v1459
    %1579 = vmatpush1.msra.mxu0 %v1458
    %1580 = vmatprep.subr.mxu0 %v1475
    %1581 = vmatpush1.msra.mxu0 %v1474
    %1582 = vmatprep.subr.mxu0 %v1491
    %1583 = vmatpush1.msra.mxu0 %v1490
    %1584 = vmatprep.subr.mxu0 0.0
    %1585 = vmatpush1.msra.mxu0 0.0
    %1586 = vmatprep.subr.mxu0 0.0
    %1587 = vmatpush1.msra.mxu0 0.0
    %1588 = vmatprep.subr.mxu0 0.0
    %1589 = vmatpush1.msra.mxu0 0.0
    %1590 = vmatprep.subr.mxu0 0.0
    %1591 = vmatpush1.msra.mxu0 0.0
    %1592 = vmatprep.subr.mxu0 0.0
    %1593 = vmatpush1.msra.mxu0 0.0
    %1594 = vmatprep.subr.mxu0 0.0
    %1595 = vmatpush1.msra.mxu0 0.0
    %1596 = vmatprep.subr.mxu0 0.0
    %1597 = vmatpush1.msra.mxu0 0.0
    %1598 = vmatprep.subr.mxu0 0.0
    %1599 = vmatpush1.msra.mxu0 0.0
    %1600 = vmatprep.subr.mxu0 0.0
    %1601 = vmatpush1.msra.mxu0 0.0
    %1602 = vmatprep.subr.mxu0 0.0
    %1603 = vmatpush1.msra.mxu0 0.0
    %1604 = vmatprep.subr.mxu0 0.0
    %1605 = vmatpush1.msra.mxu0 0.0
    %1606 = vmatprep.subr.mxu0 0.0
    %1607 = vmatpush1.msra.mxu0 0.0
    %1608 = vmatprep.subr.mxu0 0.0
    %1609 = vmatpush1.msra.mxu0 0.0
    %1610 = vmatprep.subr.mxu0 0.0
    %1611 = vmatpush1.msra.mxu0 0.0
    %1612 = vmatprep.subr.mxu0 0.0
    %1613 = vmatpush1.msra.mxu0 0.0
    %1614 = vmatprep.subr.mxu0 0.0
    %1615 = vmatpush1.msra.mxu0 0.0
    %1616 = vmatprep.subr.mxu0 0.0
    %1617 = vmatpush1.msra.mxu0 0.0
    %1618 = vmatprep.subr.mxu0 0.0
    %1619 = vmatpush1.msra.mxu0 0.0
    %1620 = vmatprep.subr.mxu0 0.0
    %1621 = vmatpush1.msra.mxu0 0.0
    %1622 = vmatprep.subr.mxu0 0.0
    %1623 = vmatpush1.msra.mxu0 0.0
    %1624 = vmatprep.subr.mxu0 0.0
    %1625 = vmatpush1.msra.mxu0 0.0
    %1626 = vmatprep.subr.mxu0 0.0
    %1627 = vmatpush1.msra.mxu0 0.0
    %1628 = vmatprep.subr.mxu0 0.0
    %1629 = vmatpush1.msra.mxu0 0.0
    %1630 = vmatprep.mubr.f32.mxu0 0.0
    %1631 = vmatmul.mubr.f32.gmra.mrb[0].mxu0 %v1493
    %v1632 = vpop.f32.mrb[0].mxu0
    %v1633 = vadd.f32 0.0, %v1632
    %v1634 = vpop.f32.mrb[0].mxu0
    %v1635 = vadd.f32 0.0, %v1634
    %1636 = vdwg.mxu0
    %vm1637 = vcmask 1043456
    %v1638 = vsel %vm1637, %v1562, 0.0
    %v1639 = vsel %vm1637, %v1564, 0.0
    %v1640 = vadd.f32 %v1638, %v1639
    %v1641 = vsel %vm1637, %v1633, 0.0
    %v1642 = vadd.f32 %v1640, %v1641
    %v1643 = vsel %vm1637, %v1635, 0.0
    %v1644 = vadd.f32 %v1642, %v1643
    %1645 = vadd.xlane.f32.xlu0 %v1644
    %v1646 = vpop.xlane.xlu0 %1645
    %v1647 = vmul.f32 %v1646, 0.001953125
    %v1648 = vsub.f32 %v1562, %v1647
    %v1649 = vsub.f32 %v1564, %v1647
    %v1650 = vsub.f32 %v1633, %v1647
    %v1651 = vsub.f32 %v1635, %v1647
    %v1652 = vmul.f32 %v1648, %v1648
    %v1653 = vmul.f32 %v1649, %v1649
    %v1654 = vmul.f32 %v1650, %v1650
    %v1655 = vmul.f32 %v1651, %v1651
    %v1656 = vsel %vm1637, %v1652, 0.0
    %v1657 = vsel %vm1637, %v1653, 0.0
    %v1658 = vadd.f32 %v1656, %v1657
    %v1659 = vsel %vm1637, %v1654, 0.0
    %v1660 = vadd.f32 %v1658, %v1659
    %v1661 = vsel %vm1637, %v1655, 0.0
    %v1662 = vadd.f32 %v1660, %v1661
    %1663 = vadd.xlane.f32.xlu0 %v1662
    %v1664 = vpop.xlane.xlu0 %1663
    %v1665 = vmul.f32 %v1664, 0.001953125
    %v1666 = vadd.f32 %v1665, 1e-05
    %v1667 = vrsqrt.pop %v1666
    %v1668 = vmul.f32 %v51, %v1667
    %1670 = vset.pattern.permute.xlu0 3
    %1671 = vperm.xlu0 %1670, %v1668
    %v1672 = vpop.permute.xlu0 %1671
    %v1674 = vmul.f32 %v1648, %v1672
    %v1675 = vmul.f32 %v1649, %v1672
    %v1676 = vmul.f32 %v1650, %v1672
    %v1677 = vmul.f32 %v1651, %v1672
    %1678 = vset.pattern.permute.xlu0 4
    %1679 = vperm.xlu0 %1678, %v51
    %v1680 = vpop.permute.xlu0 %1679
    %v1682 = vadd.f32 %v1674, %v1680
    %v1683 = vadd.f32 %v1675, %v1680
    %v1684 = vadd.f32 %v1676, %v1680
    %v1685 = vadd.f32 %v1677, %v1680
    %v1686 = vmax.f32 %v1682, 0.0
    %v1687 = vmax.f32 %v1683, 0.0
    %v1688 = vmax.f32 %v1684, 0.0
    %v1689 = vmax.f32 %v1685, 0.0
    %v1694 = vcombine.low %v1686, %v1687
    %v1695 = vcombine.low %v1688, %v1689
    %1698 = vst [vmem:[%s8] sm:$0xff] %v1694
    %1699 = vst [vmem:[%s8 + $0x8] sm:$0xff] %v1695
    // Predicated region
    $region38: #{decoder_block_forward.1} parent=1 // pred_check
      _
    $region39: #{decoder_block_forward.1} parent=1 // pred_check_branch
      %1701 = sbr.rel (0) target = $region41
    $region40: #{decoder_block_forward.1} parent=1 // pred_region
      _
    $region41: #{decoder_block_forward.1} parent=1 // pred_fallthru
      _
    // Predicated region
    $region42: #{decoder_block_forward.1} parent=1 // pred_check
      _
    $region43: #{decoder_block_forward.1} parent=1 // pred_check_branch
      %1703 = sbr.rel (0) target = $region45
    $region44: #{decoder_block_forward.1} parent=1 // pred_region
      _
    $region45: #{decoder_block_forward.1} parent=1 // pred_fallthru
      _
    %1704 = vsyncpa [#allocation3], 1

</llo_original>
